<compile_context>
chip_gen: v7x
topology: tpu7x:2x2x1
jax: 0.10.0
libtpu: 0.0.40
codegen_flags: <defaults>
</compile_context>

<pallas_src>
import functools

import jax
import jax.numpy as jnp
from jax.experimental import pallas as pl
from jax.experimental.pallas import tpu as pltpu
from jax.scipy.linalg import block_diag


def _mlp_kernel(n_layers, matmul_dtype, *refs):
    """refs = (x_ref, w0, b0, w1, b1, ..., w_{L-1}, b_{L-1}, o_ref)."""
    x_ref = refs[0]
    o_ref = refs[-1]
    wb = refs[1:-1]

    h = x_ref[...].astype(jnp.float32)               # (tile_p, g*C_in)
    for k in range(n_layers):
        w = wb[2 * k][...]                            # block-diag, pre-cast bf16
        b = wb[2 * k + 1][...]                        # (1, g*C_{k+1}) f32
        h = jnp.dot(h.astype(matmul_dtype), w,
                    preferred_element_type=jnp.float32) + b
        if k != n_layers - 1:                         # doLastRelu=False
            h = jnp.maximum(h, 0.0)
    o_ref[...] = h.astype(o_ref.dtype)


def _tensorcores_per_chip():
    """Heuristic TC count the 'parallel' grid axis can shard over (robust on
    all generations; avoids depending on exact TpuInfo attribute names)."""
    try:
        kind = jax.devices()[0].device_kind.lower()
    except Exception:
        return 1
    if ("v7" in kind) or ("v4" in kind) or ("v5p" in kind):
        return 2
    return 1


def _choose_group(M, dims, max_packed_width=512):
    """Largest g in {8,4,2,1} dividing M whose packed widths stay <= 512."""
    widest = max(dims)
    for g in (8, 4, 2, 1):
        if M % g == 0 and g * widest <= max_packed_width:
            return g
    return 1


def _choose_tile(m_packed, tile_req, n_cores):
    """Packed-row tile: a multiple of 8 sublanes, or the full row count."""
    if m_packed <= tile_req and (n_cores == 1 or m_packed < 16 * n_cores):
        return m_packed, 1                  # single full block; no forced split
    tile = min(tile_req, max(8, (m_packed // 8) * 8))
    if n_cores > 1:
        # >= 2 balanced steps per TensorCore on megacore-style chips.
        balanced = max(8, (m_packed // (2 * n_cores)) // 8 * 8)
        tile = min(tile, balanced)
    return tile, pl.cdiv(m_packed, tile)


def pointwise_mlp_pallas(x, weights, biases, *, tile_m=4096, group=None,
                         matmul_dtype=jnp.bfloat16):
    """x: (..., C_in); weights[k]: (C_k, C_{k+1}); biases[k]: (C_{k+1},)."""
    orig_shape = x.shape
    C_in = int(orig_shape[-1])
    n_layers = len(weights)
    C_out = int(weights[-1].shape[1])
    dims = (C_in,) + tuple(int(w.shape[1]) for w in weights)

    M = 1
    for d in orig_shape[:-1]:
        M *= int(d)

    g = _choose_group(M, dims) if group is None else group
    assert M % g == 0, (M, g)
    m_packed = M // g
    cp_in, cp_out = g * C_in, g * C_out

    n_cores = _tensorcores_per_chip()
    tile_req = max(8, (max(tile_m, g) // g) // 8 * 8)
    tile_p, n_tiles = _choose_tile(m_packed, tile_req, n_cores)

    # Free row-major relabels: no extra HBM traffic for input or output.
    x_packed = x.reshape(m_packed, cp_in)

    # Block-diagonal weights (cast to the MXU dtype once, outside the kernel)
    # and g-times-tiled f32 biases.
    if g == 1:
        w_bd = [w.astype(matmul_dtype) for w in weights]
    else:
        w_bd = [block_diag(*([w.astype(matmul_dtype)] * g)) for w in weights]
    b_bd = [jnp.tile(b.astype(jnp.float32), g).reshape(1, -1) for b in biases]

    in_specs = [pl.BlockSpec((tile_p, cp_in), lambda i: (i, 0))]
    for w, b in zip(w_bd, b_bd):
        in_specs.append(pl.BlockSpec(tuple(w.shape), lambda i: (0, 0)))  # resident
        in_specs.append(pl.BlockSpec(tuple(b.shape), lambda i: (0, 0)))  # resident
    out_specs = pl.BlockSpec((tile_p, cp_out), lambda i: (i, 0))
    out_shape = jax.ShapeDtypeStruct((m_packed, cp_out), x.dtype)

    # Advisory cost estimate + explicit scoped-VMEM budget.
    flops = 2 * M * sum(int(w.shape[0]) * int(w.shape[1]) for w in weights)
    bytes_w = int(sum(w.size * w.dtype.itemsize for w in w_bd))
    bytes_b = int(sum(b.size * b.dtype.itemsize for b in b_bd))
    bytes_accessed = int(M * C_in * x.dtype.itemsize
                         + M * C_out * x.dtype.itemsize + bytes_w + bytes_b)
    widest = max([cp_in] + [int(w.shape[1]) for w in w_bd])
    vmem_est = (2 * tile_p * cp_in * x.dtype.itemsize        # dbl-buffered input
                + 2 * tile_p * cp_out * x.dtype.itemsize     # dbl-buffered output
                + 2 * (bytes_w + bytes_b)                    # resident params
                + 4 * tile_p * widest * 4)                   # f32 intermediates
    vmem_limit = int(min(48 * 2 ** 20, max(16 * 2 ** 20, 2 * vmem_est)))

    kernel = functools.partial(_mlp_kernel, n_layers, matmul_dtype)

    out_packed = pl.pallas_call(
        kernel,
        out_shape=out_shape,
        grid_spec=pltpu.PrefetchScalarGridSpec(
            num_scalar_prefetch=0,
            grid=(n_tiles,),
            in_specs=in_specs,
            out_specs=out_specs,
        ),
        compiler_params=pltpu.CompilerParams(
            dimension_semantics=("parallel",),
            vmem_limit_bytes=vmem_limit,
        ),
        cost_estimate=pl.CostEstimate(
            flops=flops, transcendentals=0, bytes_accessed=bytes_accessed),
    )(x_packed, *[a for pair in zip(w_bd, b_bd) for a in pair])

    return out_packed.reshape(*orig_shape[:-1], C_out)


def pointwise_mlp_ref(x, weights, biases, matmul_dtype=jnp.float32):
    """Pure-JAX reference mirroring the kernel math (f32 accumulation)."""
    h = x.astype(jnp.float32)
    for k, (w, b) in enumerate(zip(weights, biases)):
        h = jnp.dot(h.astype(matmul_dtype), w.astype(matmul_dtype),
                    preferred_element_type=jnp.float32) + b.astype(jnp.float32)
        if k != len(weights) - 1:
            h = jnp.maximum(h, 0.0)
    return h.astype(x.dtype)


def init_params(key, dims):
    """Deterministic init mimicking nn.Linear (uniform +/- 1/sqrt(fan_in))."""
    weights, biases = [], []
    for i in range(len(dims) - 1):
        key, kw, kb = jax.random.split(key, 3)
        bound = 1.0 / jnp.sqrt(dims[i])
        weights.append(
            jax.random.uniform(kw, (dims[i], dims[i + 1]), jnp.float32,
                               minval=-bound, maxval=bound))
        biases.append(
            jax.random.uniform(kb, (dims[i + 1],), jnp.float32,
                               minval=-bound, maxval=bound))
    return weights, biases


if __name__ == "__main__":
    # GeneratorSingle(dims): pointwise MLP over per-point features.
    dims = (32, 64, 64, 16)

    key = jax.random.PRNGKey(0)
    key, kx = jax.random.split(key)
    weights, biases = init_params(key, dims)

    def check(X, **kw):
        out = jax.block_until_ready(pointwise_mlp_pallas(X, weights, biases, **kw))
        ref = pointwise_mlp_ref(X, weights, biases, matmul_dtype=jnp.bfloat16)
        assert out.shape == X.shape[:-1] + (dims[-1],), out.shape
        err = float(jnp.max(jnp.abs(out - ref)))
        assert jnp.allclose(out, ref, atol=2e-2, rtol=2e-2), err

    # 1) Single-tile path: M = 1024 rows, g = 8 -> 128 packed rows x 256 lanes.
    X = jax.random.normal(kx, (4, 256, dims[0]), dtype=jnp.float32)
    check(X)

    # 2) Ragged row count (M = 400 -> 50 packed rows; full-array block, no pad).
    check(X[:, :100])

    # 3) Multi-tile grid path (M = 4096, tile override -> multiple grid steps).
    key, kx2 = jax.random.split(key)
    X3 = jax.random.normal(kx2, (8, 512, dims[0]), dtype=jnp.float32)
    check(X3, tile_m=1024)

    # 4) Multi-tile with a ragged last block (M = 1200 -> 150 packed rows;
    #    the final partial tile is masked by Pallas, no jnp.pad / slice copy).
    check(X3[:, :150], tile_m=512)

    print("KERNEL_OK")
</pallas_src>

<mosaic_0001>
module attributes {stable_mosaic.version = 11 : i64} {
  func.func @_mlp_kernel(%arg0: i32, %arg1: memref<128x256xf32, #tpu.memory_space<vmem>>, %arg2: memref<256x512xbf16, #tpu.memory_space<vmem>>, %arg3: memref<1x512xf32, #tpu.memory_space<vmem>>, %arg4: memref<512x512xbf16, #tpu.memory_space<vmem>>, %arg5: memref<1x512xf32, #tpu.memory_space<vmem>>, %arg6: memref<512x128xbf16, #tpu.memory_space<vmem>>, %arg7: memref<1x128xf32, #tpu.memory_space<vmem>>, %arg8: memref<128x128xf32, #tpu.memory_space<vmem>>) attributes {dimension_semantics = [#tpu.dimension_semantics<parallel>], iteration_bounds = array<i64: 1>, scalar_prefetch = 0 : i64, scratch_operands = 0 : i64, tpu.core_type = #tpu.core_type<tc>, window_params = [{transform_indices = @transform_0, window_bounds = array<i64: 128, 256>}, {pipeline_mode = #tpu.pipeline_mode<synchronous>, transform_indices = @transform_1, window_bounds = array<i64: 256, 512>}, {pipeline_mode = #tpu.pipeline_mode<synchronous>, transform_indices = @transform_2, window_bounds = array<i64: 1, 512>}, {pipeline_mode = #tpu.pipeline_mode<synchronous>, transform_indices = @transform_3, window_bounds = array<i64: 512, 512>}, {pipeline_mode = #tpu.pipeline_mode<synchronous>, transform_indices = @transform_4, window_bounds = array<i64: 1, 512>}, {pipeline_mode = #tpu.pipeline_mode<synchronous>, transform_indices = @transform_5, window_bounds = array<i64: 512, 128>}, {pipeline_mode = #tpu.pipeline_mode<synchronous>, transform_indices = @transform_6, window_bounds = array<i64: 1, 128>}, {transform_indices = @transform_7, window_bounds = array<i64: 128, 128>}]} {
    %c0 = arith.constant 0 : index
    %c0_0 = arith.constant 0 : index
    %0 = vector.load %arg1[%c0, %c0_0] : memref<128x256xf32, #tpu.memory_space<vmem>>, vector<128x256xf32>
    %c0_1 = arith.constant 0 : index
    %c0_2 = arith.constant 0 : index
    %1 = vector.load %arg2[%c0_1, %c0_2] : memref<256x512xbf16, #tpu.memory_space<vmem>>, vector<256x512xbf16>
    %c0_3 = arith.constant 0 : index
    %c0_4 = arith.constant 0 : index
    %2 = vector.load %arg3[%c0_3, %c0_4] : memref<1x512xf32, #tpu.memory_space<vmem>>, vector<1x512xf32>
    %3 = arith.truncf %0 : vector<128x256xf32> to vector<128x256xbf16>
    %cst = arith.constant dense<0.000000e+00> : vector<128x512xf32>
    %4 = tpu.matmul %3, %1, %cst {dimension_numbers = #tpu.dot_dimension_numbers<[1], [0], [0], [1], [0, 0, 1, 1], [], []>} : vector<128x256xbf16>, vector<256x512xbf16>, vector<128x512xf32> -> vector<128x512xf32>
    %5 = vector.broadcast %2 : vector<1x512xf32> to vector<128x512xf32>
    %6 = arith.addf %4, %5 : vector<128x512xf32>
    %cst_5 = arith.constant 0.000000e+00 : f32
    %7 = vector.broadcast %cst_5 : f32 to vector<128x512xf32>
    %8 = arith.maximumf %6, %7 : vector<128x512xf32>
    %c0_6 = arith.constant 0 : index
    %c0_7 = arith.constant 0 : index
    %9 = vector.load %arg4[%c0_6, %c0_7] : memref<512x512xbf16, #tpu.memory_space<vmem>>, vector<512x512xbf16>
    %c0_8 = arith.constant 0 : index
    %c0_9 = arith.constant 0 : index
    %10 = vector.load %arg5[%c0_8, %c0_9] : memref<1x512xf32, #tpu.memory_space<vmem>>, vector<1x512xf32>
    %11 = arith.truncf %8 : vector<128x512xf32> to vector<128x512xbf16>
    %cst_10 = arith.constant dense<0.000000e+00> : vector<128x512xf32>
    %12 = tpu.matmul %11, %9, %cst_10 {dimension_numbers = #tpu.dot_dimension_numbers<[1], [0], [0], [1], [0, 0, 1, 1], [], []>} : vector<128x512xbf16>, vector<512x512xbf16>, vector<128x512xf32> -> vector<128x512xf32>
    %13 = vector.broadcast %10 : vector<1x512xf32> to vector<128x512xf32>
    %14 = arith.addf %12, %13 : vector<128x512xf32>
    %cst_11 = arith.constant 0.000000e+00 : f32
    %15 = vector.broadcast %cst_11 : f32 to vector<128x512xf32>
    %16 = arith.maximumf %14, %15 : vector<128x512xf32>
    %c0_12 = arith.constant 0 : index
    %c0_13 = arith.constant 0 : index
    %17 = vector.load %arg6[%c0_12, %c0_13] : memref<512x128xbf16, #tpu.memory_space<vmem>>, vector<512x128xbf16>
    %c0_14 = arith.constant 0 : index
    %c0_15 = arith.constant 0 : index
    %18 = vector.load %arg7[%c0_14, %c0_15] : memref<1x128xf32, #tpu.memory_space<vmem>>, vector<1x128xf32>
    %19 = arith.truncf %16 : vector<128x512xf32> to vector<128x512xbf16>
    %cst_16 = arith.constant dense<0.000000e+00> : vector<128x128xf32>
    %20 = tpu.matmul %19, %17, %cst_16 {dimension_numbers = #tpu.dot_dimension_numbers<[1], [0], [0], [1], [0, 0, 1, 1], [], []>} : vector<128x512xbf16>, vector<512x128xbf16>, vector<128x128xf32> -> vector<128x128xf32>
    %21 = vector.broadcast %18 : vector<1x128xf32> to vector<128x128xf32>
    %22 = arith.addf %20, %21 : vector<128x128xf32>
    %c0_17 = arith.constant 0 : index
    %c0_18 = arith.constant 0 : index
    %23 = vector.load %arg8[%c0_17, %c0_18] : memref<128x128xf32, #tpu.memory_space<vmem>>, vector<128x128xf32>
    tpu.vector_store %arg8[%c0_17, %c0_18], %22 {strides = array<i32>} : memref<128x128xf32, #tpu.memory_space<vmem>>, vector<128x128xf32>,
    return
  }
  func.func @transform_0(%arg0: i32) -> (i32, i32) {
    %c0_i32 = arith.constant 0 : i32
    %c0_i32_0 = arith.constant 0 : i32
    return %arg0, %c0_i32 : i32, i32
  }
  func.func @transform_1(%arg0: i32) -> (i32, i32) {
    %c0_i32 = arith.constant 0 : i32
    %c0_i32_0 = arith.constant 0 : i32
    %c0_i32_1 = arith.constant 0 : i32
    return %c0_i32, %c0_i32_0 : i32, i32
  }
  func.func @transform_2(%arg0: i32) -> (i32, i32) {
    %c0_i32 = arith.constant 0 : i32
    %c0_i32_0 = arith.constant 0 : i32
    %c0_i32_1 = arith.constant 0 : i32
    return %c0_i32, %c0_i32_0 : i32, i32
  }
  func.func @transform_3(%arg0: i32) -> (i32, i32) {
    %c0_i32 = arith.constant 0 : i32
    %c0_i32_0 = arith.constant 0 : i32
    %c0_i32_1 = arith.constant 0 : i32
    return %c0_i32, %c0_i32_0 : i32, i32
  }
  func.func @transform_4(%arg0: i32) -> (i32, i32) {
    %c0_i32 = arith.constant 0 : i32
    %c0_i32_0 = arith.constant 0 : i32
    %c0_i32_1 = arith.constant 0 : i32
    return %c0_i32, %c0_i32_0 : i32, i32
  }
  func.func @transform_5(%arg0: i32) -> (i32, i32) {
    %c0_i32 = arith.constant 0 : i32
    %c0_i32_0 = arith.constant 0 : i32
    %c0_i32_1 = arith.constant 0 : i32
    return %c0_i32, %c0_i32_0 : i32, i32
  }
  func.func @transform_6(%arg0: i32) -> (i32, i32) {
    %c0_i32 = arith.constant 0 : i32
    %c0_i32_0 = arith.constant 0 : i32
    %c0_i32_1 = arith.constant 0 : i32
    return %c0_i32, %c0_i32_0 : i32, i32
  }
  func.func @transform_7(%arg0: i32) -> (i32, i32) {
    %c0_i32 = arith.constant 0 : i32
    %c0_i32_0 = arith.constant 0 : i32
    return %arg0, %c0_i32 : i32, i32
  }
}

</mosaic_0001>

<llo_original>
// kernel: tpu_custom_call.1
$region0: #{tpu_custom_call.1}
  #allocation0 [shape = 'u32[]', space=smem, size = 0x4, offset = 0x4, fixed_abs, tag = 'smem constant byte address 0x4 - core index']
  #allocation1 [shape = 'u32[144,128]{1,0:T(1,128)}', space=vmem, size = 0x12000, scoped, tag = 'internal scratch']
  %s0 = inlined_call_operand.hbm [shape: f32[128,256], index: 0, kind: input, shape index: {}]
  %s1 = inlined_call_operand.hbm [shape: bf16[256,512], index: 1, kind: input, shape index: {}]
  %s2 = inlined_call_operand.vmem [shape: f32[1,512], index: 2, kind: input, shape index: {}]
  %s3 = inlined_call_operand.hbm [shape: bf16[512,512], index: 3, kind: input, shape index: {}]
  %s4 = inlined_call_operand.vmem [shape: f32[1,512], index: 4, kind: input, shape index: {}]
  %s5 = inlined_call_operand.hbm [shape: bf16[512,128], index: 5, kind: input, shape index: {}]
  %s6 = inlined_call_operand.vmem [shape: f32[1,128], index: 6, kind: input, shape index: {}]
  %s7 = inlined_call_operand.hbm [shape: f32[128,128], index: 7, kind: output, shape index: {}]
  %s8 = sld [smem:[#allocation0]]
  $region54: #{tpu_custom_call.1} parent=0
    _
  %s10 = ssub.s32 1, %s8
  %s11 = scalar_select 0, %s10, %s8
  $region1: #{tpu_custom_call.1} parent=0
    #allocation2 [shape = 'u8[131072]{0}', space=vmem, size = 0x20000, scoped, tag = 'input window, operand 0, single buffered']
    #allocation3 [shape = 's32[1]{0}', space=sflag, size = 0x4, scoped, tag = 'scoped memory for tpu_custom_call.1']
    #allocation4 [shape = 's32[1]{0}', space=sflag, size = 0x4, scoped, tag = 'scoped memory for tpu_custom_call.1']
    #allocation5 [shape = 'u8[262144]{0}', space=vmem, size = 0x40000, scoped, tag = 'input window, operand 1, single buffered']
    #allocation6 [shape = 's32[1]{0}', space=sflag, size = 0x4, scoped, tag = 'scoped memory for tpu_custom_call.1']
    #allocation7 [shape = 'u8[524288]{0}', space=vmem, size = 0x80000, scoped, tag = 'input window, operand 3, single buffered']
    #allocation8 [shape = 'u8[131072]{0}', space=vmem, size = 0x20000, scoped, tag = 'input window, operand 5, single buffered']
    #allocation9 [shape = 's32[1]{0}', space=sflag, size = 0x4, scoped, tag = 'scoped memory for tpu_custom_call.1']
    #allocation10 [shape = 'u8[65536]{0}', space=vmem, size = 0x10000, scoped, tag = 'output window, operand 0, single buffered']
    %12 = vsyncpa [#allocation3], 0
    %13 = vsyncpa [#allocation6], 0
    %14 = vsyncpa [#allocation9], 0
    %15 = vsyncpa [#allocation4], 0
    // Predicated region
    $region2: #{tpu_custom_call.1} parent=1 // pred_check
      _
    $region3: #{tpu_custom_call.1} parent=1 // pred_check_branch
      %17 = sbr.rel (0) target = $region5
    $region4: #{tpu_custom_call.1} parent=1 // pred_region
      %s19 = ssub.s32 4096, 4096
      %20 = vsyncadd [#allocation3], %s19
      %s21 = sshll.u32 [#allocation2], 4
      %s22 = int_to_ptr.vmem [resolvable:$true] %s21
      %27 = dma.hbm_to_vmem [thread:$0]  %s0, 4096, %s22, [#allocation3], 256, 256, 16
    $region5: #{tpu_custom_call.1} parent=1 // pred_fallthru
      _
    // Predicated region
    $region6: #{tpu_custom_call.1} parent=1 // pred_check
      _
    $region7: #{tpu_custom_call.1} parent=1 // pred_check_branch
      %29 = sbr.rel (0) target = $region9
    $region8: #{tpu_custom_call.1} parent=1 // pred_region
      %s31 = ssub.s32 8192, 8192
      %32 = vsyncadd [#allocation6], %s31
      %s33 = sshll.u32 [#allocation5], 4
      %s34 = int_to_ptr.vmem [resolvable:$true] %s33
      %39 = dma.hbm_to_vmem [thread:$0]  %s1, 8192, %s34, [#allocation6], 256, 256, 16
    $region9: #{tpu_custom_call.1} parent=1 // pred_fallthru
      _
    // Predicated region
    $region10: #{tpu_custom_call.1} parent=1 // pred_check
      _
    $region11: #{tpu_custom_call.1} parent=1 // pred_check_branch
      %41 = sbr.rel (0) target = $region13
    $region12: #{tpu_custom_call.1} parent=1 // pred_region
      _
    $region13: #{tpu_custom_call.1} parent=1 // pred_fallthru
      _
    // Predicated region
    $region14: #{tpu_custom_call.1} parent=1 // pred_check
      _
    $region15: #{tpu_custom_call.1} parent=1 // pred_check_branch
      %43 = sbr.rel (0) target = $region17
    $region16: #{tpu_custom_call.1} parent=1 // pred_region
      %s45 = ssub.s32 16384, 16384
      %46 = vsyncadd [#allocation6], %s45
      %s47 = sshll.u32 [#allocation7], 4
      %s48 = int_to_ptr.vmem [resolvable:$true] %s47
      %53 = dma.hbm_to_vmem [thread:$0]  %s3, 16384, %s48, [#allocation6], 256, 256, 16
    $region17: #{tpu_custom_call.1} parent=1 // pred_fallthru
      _
    // Predicated region
    $region18: #{tpu_custom_call.1} parent=1 // pred_check
      _
    $region19: #{tpu_custom_call.1} parent=1 // pred_check_branch
      %55 = sbr.rel (0) target = $region21
    $region20: #{tpu_custom_call.1} parent=1 // pred_region
      _
    $region21: #{tpu_custom_call.1} parent=1 // pred_fallthru
      _
    // Predicated region
    $region22: #{tpu_custom_call.1} parent=1 // pred_check
      _
    $region23: #{tpu_custom_call.1} parent=1 // pred_check_branch
      %57 = sbr.rel (0) target = $region25
    $region24: #{tpu_custom_call.1} parent=1 // pred_region
      %s59 = ssub.s32 4096, 4096
      %60 = vsyncadd [#allocation9], %s59
      %s61 = sshll.u32 [#allocation8], 4
      %s62 = int_to_ptr.vmem [resolvable:$true] %s61
      %67 = dma.hbm_to_vmem [thread:$0]  %s5, 4096, %s62, [#allocation9], 64, 64, 4
    $region25: #{tpu_custom_call.1} parent=1 // pred_fallthru
      _
    // Predicated region
    $region26: #{tpu_custom_call.1} parent=1 // pred_check
      _
    $region27: #{tpu_custom_call.1} parent=1 // pred_check_branch
      %69 = sbr.rel (0) target = $region29
    $region28: #{tpu_custom_call.1} parent=1 // pred_region
      _
    $region29: #{tpu_custom_call.1} parent=1 // pred_fallthru
      _
    // Predicated region
    $region30: #{tpu_custom_call.1} parent=1 // pred_check
      _
    $region31: #{tpu_custom_call.1} parent=1 // pred_check_branch
      %71 = sbr.rel (0) target = $region33
    $region32: #{tpu_custom_call.1} parent=1 // pred_region
      %72 = dma.done [#allocation3], 4096
    $region33: #{tpu_custom_call.1} parent=1 // pred_fallthru
      _
    // Predicated region
    $region34: #{tpu_custom_call.1} parent=1 // pred_check
      _
    $region35: #{tpu_custom_call.1} parent=1 // pred_check_branch
      %74 = sbr.rel (0) target = $region37
    $region36: #{tpu_custom_call.1} parent=1 // pred_region
      %75 = dma.done [#allocation6], 8192
    $region37: #{tpu_custom_call.1} parent=1 // pred_fallthru
      _
    // Predicated region
    $region38: #{tpu_custom_call.1} parent=1 // pred_check
      _
    $region39: #{tpu_custom_call.1} parent=1 // pred_check_branch
      %77 = sbr.rel (0) target = $region41
    $region40: #{tpu_custom_call.1} parent=1 // pred_region
      %78 = dma.done [#allocation6], 16384
    $region41: #{tpu_custom_call.1} parent=1 // pred_fallthru
      _
    // Predicated region
    $region42: #{tpu_custom_call.1} parent=1 // pred_check
      _
    $region43: #{tpu_custom_call.1} parent=1 // pred_check_branch
      %80 = sbr.rel (0) target = $region45
    $region44: #{tpu_custom_call.1} parent=1 // pred_region
      %81 = dma.done [#allocation9], 4096
    $region45: #{tpu_custom_call.1} parent=1 // pred_fallthru
      _
    %v83 = vld [vmem:[#allocation2] sm:$0xff]
    %v84 = vld [vmem:[#allocation2 + $0x8] sm:$0xff]
    %v85 = vld [vmem:[#allocation2 + $0x10] sm:$0xff]
    %v86 = vld [vmem:[#allocation2 + $0x18] sm:$0xff]
    %v87 = vld [vmem:[#allocation2 + $0x20] sm:$0xff]
    %v88 = vld [vmem:[#allocation2 + $0x28] sm:$0xff]
    %v89 = vld [vmem:[#allocation2 + $0x30] sm:$0xff]
    %v90 = vld [vmem:[#allocation2 + $0x38] sm:$0xff]
    %v91 = vld [vmem:[#allocation2 + $0x40] sm:$0xff]
    %v92 = vld [vmem:[#allocation2 + $0x48] sm:$0xff]
    %v93 = vld [vmem:[#allocation2 + $0x50] sm:$0xff]
    %v94 = vld [vmem:[#allocation2 + $0x58] sm:$0xff]
    %v95 = vld [vmem:[#allocation2 + $0x60] sm:$0xff]
    %v96 = vld [vmem:[#allocation2 + $0x68] sm:$0xff]
    %v97 = vld [vmem:[#allocation2 + $0x70] sm:$0xff]
    %v98 = vld [vmem:[#allocation2 + $0x78] sm:$0xff]
    %v99 = vld [vmem:[#allocation2 + $0x80] sm:$0xff]
    %v100 = vld [vmem:[#allocation2 + $0x88] sm:$0xff]
    %v101 = vld [vmem:[#allocation2 + $0x90] sm:$0xff]
    %v102 = vld [vmem:[#allocation2 + $0x98] sm:$0xff]
    %v103 = vld [vmem:[#allocation2 + $0xa0] sm:$0xff]
    %v104 = vld [vmem:[#allocation2 + $0xa8] sm:$0xff]
    %v105 = vld [vmem:[#allocation2 + $0xb0] sm:$0xff]
    %v106 = vld [vmem:[#allocation2 + $0xb8] sm:$0xff]
    %v107 = vld [vmem:[#allocation2 + $0xc0] sm:$0xff]
    %v108 = vld [vmem:[#allocation2 + $0xc8] sm:$0xff]
    %v109 = vld [vmem:[#allocation2 + $0xd0] sm:$0xff]
    %v110 = vld [vmem:[#allocation2 + $0xd8] sm:$0xff]
    %v111 = vld [vmem:[#allocation2 + $0xe0] sm:$0xff]
    %v112 = vld [vmem:[#allocation2 + $0xe8] sm:$0xff]
    %v113 = vld [vmem:[#allocation2 + $0xf0] sm:$0xff]
    %v114 = vld [vmem:[#allocation2 + $0xf8] sm:$0xff]
    %v115 = vld [vmem:[#allocation5] sm:$0xff]
    %v116 = vld [vmem:[#allocation5 + $0x8] sm:$0xff]
    %v117 = vld [vmem:[#allocation5 + $0x10] sm:$0xff]
    %v118 = vld [vmem:[#allocation5 + $0x18] sm:$0xff]
    %v119 = vld [vmem:[#allocation5 + $0x20] sm:$0xff]
    %v120 = vld [vmem:[#allocation5 + $0x28] sm:$0xff]
    %v121 = vld [vmem:[#allocation5 + $0x30] sm:$0xff]
    %v122 = vld [vmem:[#allocation5 + $0x38] sm:$0xff]
    %v123 = vld [vmem:[#allocation5 + $0x40] sm:$0xff]
    %v124 = vld [vmem:[#allocation5 + $0x48] sm:$0xff]
    %v125 = vld [vmem:[#allocation5 + $0x50] sm:$0xff]
    %v126 = vld [vmem:[#allocation5 + $0x58] sm:$0xff]
    %v127 = vld [vmem:[#allocation5 + $0x60] sm:$0xff]
    %v128 = vld [vmem:[#allocation5 + $0x68] sm:$0xff]
    %v129 = vld [vmem:[#allocation5 + $0x70] sm:$0xff]
    %v130 = vld [vmem:[#allocation5 + $0x78] sm:$0xff]
    %v131 = vld [vmem:[#allocation5 + $0x80] sm:$0xff]
    %v132 = vld [vmem:[#allocation5 + $0x88] sm:$0xff]
    %v133 = vld [vmem:[#allocation5 + $0x90] sm:$0xff]
    %v134 = vld [vmem:[#allocation5 + $0x98] sm:$0xff]
    %v135 = vld [vmem:[#allocation5 + $0xa0] sm:$0xff]
    %v136 = vld [vmem:[#allocation5 + $0xa8] sm:$0xff]
    %v137 = vld [vmem:[#allocation5 + $0xb0] sm:$0xff]
    %v138 = vld [vmem:[#allocation5 + $0xb8] sm:$0xff]
    %v139 = vld [vmem:[#allocation5 + $0xc0] sm:$0xff]
    %v140 = vld [vmem:[#allocation5 + $0xc8] sm:$0xff]
    %v141 = vld [vmem:[#allocation5 + $0xd0] sm:$0xff]
    %v142 = vld [vmem:[#allocation5 + $0xd8] sm:$0xff]
    %v143 = vld [vmem:[#allocation5 + $0xe0] sm:$0xff]
    %v144 = vld [vmem:[#allocation5 + $0xe8] sm:$0xff]
    %v145 = vld [vmem:[#allocation5 + $0xf0] sm:$0xff]
    %v146 = vld [vmem:[#allocation5 + $0xf8] sm:$0xff]
    %v147 = vld [vmem:[#allocation5 + $0x100] sm:$0xff]
    %v148 = vld [vmem:[#allocation5 + $0x108] sm:$0xff]
    %v149 = vld [vmem:[#allocation5 + $0x110] sm:$0xff]
    %v150 = vld [vmem:[#allocation5 + $0x118] sm:$0xff]
    %v151 = vld [vmem:[#allocation5 + $0x120] sm:$0xff]
    %v152 = vld [vmem:[#allocation5 + $0x128] sm:$0xff]
    %v153 = vld [vmem:[#allocation5 + $0x130] sm:$0xff]
    %v154 = vld [vmem:[#allocation5 + $0x138] sm:$0xff]
    %v155 = vld [vmem:[#allocation5 + $0x140] sm:$0xff]
    %v156 = vld [vmem:[#allocation5 + $0x148] sm:$0xff]
    %v157 = vld [vmem:[#allocation5 + $0x150] sm:$0xff]
    %v158 = vld [vmem:[#allocation5 + $0x158] sm:$0xff]
    %v159 = vld [vmem:[#allocation5 + $0x160] sm:$0xff]
    %v160 = vld [vmem:[#allocation5 + $0x168] sm:$0xff]
    %v161 = vld [vmem:[#allocation5 + $0x170] sm:$0xff]
    %v162 = vld [vmem:[#allocation5 + $0x178] sm:$0xff]
    %v163 = vld [vmem:[#allocation5 + $0x180] sm:$0xff]
    %v164 = vld [vmem:[#allocation5 + $0x188] sm:$0xff]
    %v165 = vld [vmem:[#allocation5 + $0x190] sm:$0xff]
    %v166 = vld [vmem:[#allocation5 + $0x198] sm:$0xff]
    %v167 = vld [vmem:[#allocation5 + $0x1a0] sm:$0xff]
    %v168 = vld [vmem:[#allocation5 + $0x1a8] sm:$0xff]
    %v169 = vld [vmem:[#allocation5 + $0x1b0] sm:$0xff]
    %v170 = vld [vmem:[#allocation5 + $0x1b8] sm:$0xff]
    %v171 = vld [vmem:[#allocation5 + $0x1c0] sm:$0xff]
    %v172 = vld [vmem:[#allocation5 + $0x1c8] sm:$0xff]
    %v173 = vld [vmem:[#allocation5 + $0x1d0] sm:$0xff]
    %v174 = vld [vmem:[#allocation5 + $0x1d8] sm:$0xff]
    %v175 = vld [vmem:[#allocation5 + $0x1e0] sm:$0xff]
    %v176 = vld [vmem:[#allocation5 + $0x1e8] sm:$0xff]
    %v177 = vld [vmem:[#allocation5 + $0x1f0] sm:$0xff]
    %v178 = vld [vmem:[#allocation5 + $0x1f8] sm:$0xff]
    %v179 = vld [vmem:[%s2] sm:$0xf]
    %v180 = vpack.c.bf16 %v85, %v83
    %v181 = vpack.c.bf16 %v86, %v84
    %v182 = vpack.c.bf16 %v89, %v87
    %v183 = vpack.c.bf16 %v90, %v88
    %v184 = vpack.c.bf16 %v93, %v91
    %v185 = vpack.c.bf16 %v94, %v92
    %v186 = vpack.c.bf16 %v97, %v95
    %v187 = vpack.c.bf16 %v98, %v96
    %v188 = vpack.c.bf16 %v101, %v99
    %v189 = vpack.c.bf16 %v102, %v100
    %v190 = vpack.c.bf16 %v105, %v103
    %v191 = vpack.c.bf16 %v106, %v104
    %v192 = vpack.c.bf16 %v109, %v107
    %v193 = vpack.c.bf16 %v110, %v108
    %v194 = vpack.c.bf16 %v113, %v111
    %v195 = vpack.c.bf16 %v114, %v112
    %v197 = vlaneseq
    %v198 = vshrl.u32 %v197, 7
    %v199 = vsub.s32 0, %v198
    %v200 = vrot.slane %v179, %v199
    %v201 = vlaneseq
    %v202 = vshrl.u32 %v201, 7
    %v203 = vsub.s32 1, %v202
    %v204 = vrot.slane %v179, %v203
    %v205 = vlaneseq
    %v206 = vshrl.u32 %v205, 7
    %v207 = vsub.s32 2, %v206
    %v208 = vrot.slane %v179, %v207
    %v209 = vlaneseq
    %v210 = vshrl.u32 %v209, 7
    %v211 = vsub.s32 3, %v210
    %v212 = vrot.slane %v179, %v211
    %v281 = vunpack.c.l.b16 %v115
    %v282 = vunpack.c.h.b16 %v115
    %v283 = vunpack.c.l.b16 %v116
    %v284 = vunpack.c.h.b16 %v116
    %v285 = vunpack.c.l.b16 %v117
    %v286 = vunpack.c.h.b16 %v117
    %v287 = vunpack.c.l.b16 %v118
    %v288 = vunpack.c.h.b16 %v118
    %v289 = vunpack.c.l.b16 %v119
    %v290 = vunpack.c.h.b16 %v119
    %v291 = vunpack.c.l.b16 %v120
    %v292 = vunpack.c.h.b16 %v120
    %v293 = vunpack.c.l.b16 %v121
    %v294 = vunpack.c.h.b16 %v121
    %v295 = vunpack.c.l.b16 %v122
    %v296 = vunpack.c.h.b16 %v122
    %v297 = vunpack.c.l.b16 %v123
    %v298 = vunpack.c.h.b16 %v123
    %v299 = vunpack.c.l.b16 %v124
    %v300 = vunpack.c.h.b16 %v124
    %v301 = vunpack.c.l.b16 %v125
    %v302 = vunpack.c.h.b16 %v125
    %v303 = vunpack.c.l.b16 %v126
    %v304 = vunpack.c.h.b16 %v126
    %v305 = vunpack.c.l.b16 %v127
    %v306 = vunpack.c.h.b16 %v127
    %v307 = vunpack.c.l.b16 %v128
    %v308 = vunpack.c.h.b16 %v128
    %v309 = vunpack.c.l.b16 %v129
    %v310 = vunpack.c.h.b16 %v129
    %v311 = vunpack.c.l.b16 %v130
    %v312 = vunpack.c.h.b16 %v130
    %v313 = vunpack.c.l.b16 %v131
    %v314 = vunpack.c.h.b16 %v131
    %v315 = vunpack.c.l.b16 %v132
    %v316 = vunpack.c.h.b16 %v132
    %v317 = vunpack.c.l.b16 %v133
    %v318 = vunpack.c.h.b16 %v133
    %v319 = vunpack.c.l.b16 %v134
    %v320 = vunpack.c.h.b16 %v134
    %v321 = vunpack.c.l.b16 %v135
    %v322 = vunpack.c.h.b16 %v135
    %v323 = vunpack.c.l.b16 %v136
    %v324 = vunpack.c.h.b16 %v136
    %v325 = vunpack.c.l.b16 %v137
    %v326 = vunpack.c.h.b16 %v137
    %v327 = vunpack.c.l.b16 %v138
    %v328 = vunpack.c.h.b16 %v138
    %v329 = vunpack.c.l.b16 %v139
    %v330 = vunpack.c.h.b16 %v139
    %v331 = vunpack.c.l.b16 %v140
    %v332 = vunpack.c.h.b16 %v140
    %v333 = vunpack.c.l.b16 %v141
    %v334 = vunpack.c.h.b16 %v141
    %v335 = vunpack.c.l.b16 %v142
    %v336 = vunpack.c.h.b16 %v142
    %v337 = vunpack.c.l.b16 %v143
    %v338 = vunpack.c.h.b16 %v143
    %v339 = vunpack.c.l.b16 %v144
    %v340 = vunpack.c.h.b16 %v144
    %v341 = vunpack.c.l.b16 %v145
    %v342 = vunpack.c.h.b16 %v145
    %v343 = vunpack.c.l.b16 %v146
    %v344 = vunpack.c.h.b16 %v146
    %v345 = vunpack.c.l.b16 %v147
    %v346 = vunpack.c.h.b16 %v147
    %v347 = vunpack.c.l.b16 %v148
    %v348 = vunpack.c.h.b16 %v148
    %v349 = vunpack.c.l.b16 %v149
    %v350 = vunpack.c.h.b16 %v149
    %v351 = vunpack.c.l.b16 %v150
    %v352 = vunpack.c.h.b16 %v150
    %v353 = vunpack.c.l.b16 %v151
    %v354 = vunpack.c.h.b16 %v151
    %v355 = vunpack.c.l.b16 %v152
    %v356 = vunpack.c.h.b16 %v152
    %v357 = vunpack.c.l.b16 %v153
    %v358 = vunpack.c.h.b16 %v153
    %v359 = vunpack.c.l.b16 %v154
    %v360 = vunpack.c.h.b16 %v154
    %v361 = vunpack.c.l.b16 %v155
    %v362 = vunpack.c.h.b16 %v155
    %v363 = vunpack.c.l.b16 %v156
    %v364 = vunpack.c.h.b16 %v156
    %v365 = vunpack.c.l.b16 %v157
    %v366 = vunpack.c.h.b16 %v157
    %v367 = vunpack.c.l.b16 %v158
    %v368 = vunpack.c.h.b16 %v158
    %v369 = vunpack.c.l.b16 %v159
    %v370 = vunpack.c.h.b16 %v159
    %v371 = vunpack.c.l.b16 %v160
    %v372 = vunpack.c.h.b16 %v160
    %v373 = vunpack.c.l.b16 %v161
    %v374 = vunpack.c.h.b16 %v161
    %v375 = vunpack.c.l.b16 %v162
    %v376 = vunpack.c.h.b16 %v162
    %v377 = vunpack.c.l.b16 %v163
    %v378 = vunpack.c.h.b16 %v163
    %v379 = vunpack.c.l.b16 %v164
    %v380 = vunpack.c.h.b16 %v164
    %v381 = vunpack.c.l.b16 %v165
    %v382 = vunpack.c.h.b16 %v165
    %v383 = vunpack.c.l.b16 %v166
    %v384 = vunpack.c.h.b16 %v166
    %v385 = vunpack.c.l.b16 %v167
    %v386 = vunpack.c.h.b16 %v167
    %v387 = vunpack.c.l.b16 %v168
    %v388 = vunpack.c.h.b16 %v168
    %v389 = vunpack.c.l.b16 %v169
    %v390 = vunpack.c.h.b16 %v169
    %v391 = vunpack.c.l.b16 %v170
    %v392 = vunpack.c.h.b16 %v170
    %v393 = vunpack.c.l.b16 %v171
    %v394 = vunpack.c.h.b16 %v171
    %v395 = vunpack.c.l.b16 %v172
    %v396 = vunpack.c.h.b16 %v172
    %v397 = vunpack.c.l.b16 %v173
    %v398 = vunpack.c.h.b16 %v173
    %v399 = vunpack.c.l.b16 %v174
    %v400 = vunpack.c.h.b16 %v174
    %v401 = vunpack.c.l.b16 %v175
    %v402 = vunpack.c.h.b16 %v175
    %v403 = vunpack.c.l.b16 %v176
    %v404 = vunpack.c.h.b16 %v176
    %v405 = vunpack.c.l.b16 %v177
    %v406 = vunpack.c.h.b16 %v177
    %v407 = vunpack.c.l.b16 %v178
    %v408 = vunpack.c.h.b16 %v178
    %v409 = vpack.c.b16 %v285, %v281
    %v410 = vpack.c.b16 %v286, %v282
    %v411 = vpack.c.b16 %v287, %v283
    %v412 = vpack.c.b16 %v288, %v284
    %v413 = vpack.c.b16 %v293, %v289
    %v414 = vpack.c.b16 %v294, %v290
    %v415 = vpack.c.b16 %v295, %v291
    %v416 = vpack.c.b16 %v296, %v292
    %v417 = vpack.c.b16 %v301, %v297
    %v418 = vpack.c.b16 %v302, %v298
    %v419 = vpack.c.b16 %v303, %v299
    %v420 = vpack.c.b16 %v304, %v300
    %v421 = vpack.c.b16 %v309, %v305
    %v422 = vpack.c.b16 %v310, %v306
    %v423 = vpack.c.b16 %v311, %v307
    %v424 = vpack.c.b16 %v312, %v308
    %v425 = vpack.c.b16 %v317, %v313
    %v426 = vpack.c.b16 %v318, %v314
    %v427 = vpack.c.b16 %v319, %v315
    %v428 = vpack.c.b16 %v320, %v316
    %v429 = vpack.c.b16 %v325, %v321
    %v430 = vpack.c.b16 %v326, %v322
    %v431 = vpack.c.b16 %v327, %v323
    %v432 = vpack.c.b16 %v328, %v324
    %v433 = vpack.c.b16 %v333, %v329
    %v434 = vpack.c.b16 %v334, %v330
    %v435 = vpack.c.b16 %v335, %v331
    %v436 = vpack.c.b16 %v336, %v332
    %v437 = vpack.c.b16 %v341, %v337
    %v438 = vpack.c.b16 %v342, %v338
    %v439 = vpack.c.b16 %v343, %v339
    %v440 = vpack.c.b16 %v344, %v340
    %v441 = vpack.c.b16 %v349, %v345
    %v442 = vpack.c.b16 %v350, %v346
    %v443 = vpack.c.b16 %v351, %v347
    %v444 = vpack.c.b16 %v352, %v348
    %v445 = vpack.c.b16 %v357, %v353
    %v446 = vpack.c.b16 %v358, %v354
    %v447 = vpack.c.b16 %v359, %v355
    %v448 = vpack.c.b16 %v360, %v356
    %v449 = vpack.c.b16 %v365, %v361
    %v450 = vpack.c.b16 %v366, %v362
    %v451 = vpack.c.b16 %v367, %v363
    %v452 = vpack.c.b16 %v368, %v364
    %v453 = vpack.c.b16 %v373, %v369
    %v454 = vpack.c.b16 %v374, %v370
    %v455 = vpack.c.b16 %v375, %v371
    %v456 = vpack.c.b16 %v376, %v372
    %v457 = vpack.c.b16 %v381, %v377
    %v458 = vpack.c.b16 %v382, %v378
    %v459 = vpack.c.b16 %v383, %v379
    %v460 = vpack.c.b16 %v384, %v380
    %v461 = vpack.c.b16 %v389, %v385
    %v462 = vpack.c.b16 %v390, %v386
    %v463 = vpack.c.b16 %v391, %v387
    %v464 = vpack.c.b16 %v392, %v388
    %v465 = vpack.c.b16 %v397, %v393
    %v466 = vpack.c.b16 %v398, %v394
    %v467 = vpack.c.b16 %v399, %v395
    %v468 = vpack.c.b16 %v400, %v396
    %v469 = vpack.c.b16 %v405, %v401
    %v470 = vpack.c.b16 %v406, %v402
    %v471 = vpack.c.b16 %v407, %v403
    %v472 = vpack.c.b16 %v408, %v404
    %537 = vmatprep.subr.bf16.mxu0 %v410
    %538 = vmatpush1.bf16.msra.mxu0 %v409
    %539 = vmatprep.subr.bf16.mxu0 %v414
    %540 = vmatpush1.bf16.msra.mxu0 %v413
    %541 = vmatprep.subr.bf16.mxu0 %v418
    %542 = vmatpush1.bf16.msra.mxu0 %v417
    %543 = vmatprep.subr.bf16.mxu0 %v422
    %544 = vmatpush1.bf16.msra.mxu0 %v421
    %545 = vmatprep.subr.bf16.mxu0 %v426
    %546 = vmatpush1.bf16.msra.mxu0 %v425
    %547 = vmatprep.subr.bf16.mxu0 %v430
    %548 = vmatpush1.bf16.msra.mxu0 %v429
    %549 = vmatprep.subr.bf16.mxu0 %v434
    %550 = vmatpush1.bf16.msra.mxu0 %v433
    %551 = vmatprep.subr.bf16.mxu0 %v438
    %552 = vmatpush1.bf16.msra.mxu0 %v437
    %553 = vmatprep.subr.bf16.mxu0 %v442
    %554 = vmatpush1.bf16.msra.mxu0 %v441
    %555 = vmatprep.subr.bf16.mxu0 %v446
    %556 = vmatpush1.bf16.msra.mxu0 %v445
    %557 = vmatprep.subr.bf16.mxu0 %v450
    %558 = vmatpush1.bf16.msra.mxu0 %v449
    %559 = vmatprep.subr.bf16.mxu0 %v454
    %560 = vmatpush1.bf16.msra.mxu0 %v453
    %561 = vmatprep.subr.bf16.mxu0 %v458
    %562 = vmatpush1.bf16.msra.mxu0 %v457
    %563 = vmatprep.subr.bf16.mxu0 %v462
    %564 = vmatpush1.bf16.msra.mxu0 %v461
    %565 = vmatprep.subr.bf16.mxu0 %v466
    %566 = vmatpush1.bf16.msra.mxu0 %v465
    %567 = vmatprep.subr.bf16.mxu0 %v470
    %568 = vmatpush1.bf16.msra.mxu0 %v469
    %569 = vmatprep.mubr.bf16.mxu0 %v181
    %570 = vmatmul.mubr.bf16.gmra.mrb[0].mxu0 %v180
    %v571 = vpop.f32.mrb[0].mxu0
    %v572 = vadd.f32 %v200, %v571
    %v573 = vpop.f32.mrb[0].mxu0
    %v574 = vadd.f32 %v204, %v573
    %v575 = vpop.f32.mrb[0].mxu0
    %v576 = vadd.f32 %v200, %v575
    %v577 = vpop.f32.mrb[0].mxu0
    %v578 = vadd.f32 %v204, %v577
    %579 = vmatprep.mubr.bf16.mxu0 %v183
    %580 = vmatmul.mubr.bf16.gmra.mrb[0].mxu0 %v182
    %v581 = vpop.f32.mrb[0].mxu0
    %v582 = vadd.f32 %v200, %v581
    %v583 = vpop.f32.mrb[0].mxu0
    %v584 = vadd.f32 %v204, %v583
    %v585 = vpop.f32.mrb[0].mxu0
    %v586 = vadd.f32 %v200, %v585
    %v587 = vpop.f32.mrb[0].mxu0
    %v588 = vadd.f32 %v204, %v587
    %589 = vmatprep.mubr.bf16.mxu0 %v185
    %590 = vmatmul.mubr.bf16.gmra.mrb[0].mxu0 %v184
    %v591 = vpop.f32.mrb[0].mxu0
    %v592 = vadd.f32 %v200, %v591
    %v593 = vpop.f32.mrb[0].mxu0
    %v594 = vadd.f32 %v204, %v593
    %v595 = vpop.f32.mrb[0].mxu0
    %v596 = vadd.f32 %v200, %v595
    %v597 = vpop.f32.mrb[0].mxu0
    %v598 = vadd.f32 %v204, %v597
    %599 = vmatprep.mubr.bf16.mxu0 %v187
    %600 = vmatmul.mubr.bf16.gmra.mrb[0].mxu0 %v186
    %v601 = vpop.f32.mrb[0].mxu0
    %v602 = vadd.f32 %v200, %v601
    %v603 = vpop.f32.mrb[0].mxu0
    %v604 = vadd.f32 %v204, %v603
    %v605 = vpop.f32.mrb[0].mxu0
    %v606 = vadd.f32 %v200, %v605
    %v607 = vpop.f32.mrb[0].mxu0
    %v608 = vadd.f32 %v204, %v607
    %609 = vmatprep.mubr.bf16.mxu0 %v189
    %610 = vmatmul.mubr.bf16.gmra.mrb[0].mxu0 %v188
    %v611 = vpop.f32.mrb[0].mxu0
    %v612 = vadd.f32 %v200, %v611
    %v613 = vpop.f32.mrb[0].mxu0
    %v614 = vadd.f32 %v204, %v613
    %v615 = vpop.f32.mrb[0].mxu0
    %v616 = vadd.f32 %v200, %v615
    %v617 = vpop.f32.mrb[0].mxu0
    %v618 = vadd.f32 %v204, %v617
    %619 = vmatprep.mubr.bf16.mxu0 %v191
    %620 = vmatmul.mubr.bf16.gmra.mrb[0].mxu0 %v190
    %v621 = vpop.f32.mrb[0].mxu0
    %v622 = vadd.f32 %v200, %v621
    %v623 = vpop.f32.mrb[0].mxu0
    %v624 = vadd.f32 %v204, %v623
    %v625 = vpop.f32.mrb[0].mxu0
    %v626 = vadd.f32 %v200, %v625
    %v627 = vpop.f32.mrb[0].mxu0
    %v628 = vadd.f32 %v204, %v627
    %629 = vmatprep.mubr.bf16.mxu0 %v193
    %630 = vmatmul.mubr.bf16.gmra.mrb[0].mxu0 %v192
    %v631 = vpop.f32.mrb[0].mxu0
    %v632 = vadd.f32 %v200, %v631
    %v633 = vpop.f32.mrb[0].mxu0
    %v634 = vadd.f32 %v204, %v633
    %v635 = vpop.f32.mrb[0].mxu0
    %v636 = vadd.f32 %v200, %v635
    %v637 = vpop.f32.mrb[0].mxu0
    %v638 = vadd.f32 %v204, %v637
    %639 = vmatprep.mubr.bf16.mxu0 %v195
    %640 = vmatmul.mubr.bf16.gmra.mrb[0].mxu0 %v194
    %v641 = vpop.f32.mrb[0].mxu0
    %v642 = vadd.f32 %v200, %v641
    %v643 = vpop.f32.mrb[0].mxu0
    %v644 = vadd.f32 %v204, %v643
    %v645 = vpop.f32.mrb[0].mxu0
    %v646 = vadd.f32 %v200, %v645
    %v647 = vpop.f32.mrb[0].mxu0
    %v648 = vadd.f32 %v204, %v647
    %649 = vdwg.mxu0
    %650 = vmatprep.subr.bf16.mxu0 %v412
    %651 = vmatpush1.bf16.msra.mxu0 %v411
    %652 = vmatprep.subr.bf16.mxu0 %v416
    %653 = vmatpush1.bf16.msra.mxu0 %v415
    %654 = vmatprep.subr.bf16.mxu0 %v420
    %655 = vmatpush1.bf16.msra.mxu0 %v419
    %656 = vmatprep.subr.bf16.mxu0 %v424
    %657 = vmatpush1.bf16.msra.mxu0 %v423
    %658 = vmatprep.subr.bf16.mxu0 %v428
    %659 = vmatpush1.bf16.msra.mxu0 %v427
    %660 = vmatprep.subr.bf16.mxu0 %v432
    %661 = vmatpush1.bf16.msra.mxu0 %v431
    %662 = vmatprep.subr.bf16.mxu0 %v436
    %663 = vmatpush1.bf16.msra.mxu0 %v435
    %664 = vmatprep.subr.bf16.mxu0 %v440
    %665 = vmatpush1.bf16.msra.mxu0 %v439
    %666 = vmatprep.subr.bf16.mxu0 %v444
    %667 = vmatpush1.bf16.msra.mxu0 %v443
    %668 = vmatprep.subr.bf16.mxu0 %v448
    %669 = vmatpush1.bf16.msra.mxu0 %v447
    %670 = vmatprep.subr.bf16.mxu0 %v452
    %671 = vmatpush1.bf16.msra.mxu0 %v451
    %672 = vmatprep.subr.bf16.mxu0 %v456
    %673 = vmatpush1.bf16.msra.mxu0 %v455
    %674 = vmatprep.subr.bf16.mxu0 %v460
    %675 = vmatpush1.bf16.msra.mxu0 %v459
    %676 = vmatprep.subr.bf16.mxu0 %v464
    %677 = vmatpush1.bf16.msra.mxu0 %v463
    %678 = vmatprep.subr.bf16.mxu0 %v468
    %679 = vmatpush1.bf16.msra.mxu0 %v467
    %680 = vmatprep.subr.bf16.mxu0 %v472
    %681 = vmatpush1.bf16.msra.mxu0 %v471
    %682 = vmatprep.mubr.bf16.mxu0 %v181
    %683 = vmatmul.mubr.bf16.gmra.mrb[0].mxu0 %v180
    %v684 = vpop.f32.mrb[0].mxu0
    %v685 = vadd.f32 %v208, %v684
    %v686 = vpop.f32.mrb[0].mxu0
    %v687 = vadd.f32 %v212, %v686
    %v688 = vpop.f32.mrb[0].mxu0
    %v689 = vadd.f32 %v208, %v688
    %v690 = vpop.f32.mrb[0].mxu0
    %v691 = vadd.f32 %v212, %v690
    %692 = vmatprep.mubr.bf16.mxu0 %v183
    %693 = vmatmul.mubr.bf16.gmra.mrb[0].mxu0 %v182
    %v694 = vpop.f32.mrb[0].mxu0
    %v695 = vadd.f32 %v208, %v694
    %v696 = vpop.f32.mrb[0].mxu0
    %v697 = vadd.f32 %v212, %v696
    %v698 = vpop.f32.mrb[0].mxu0
    %v699 = vadd.f32 %v208, %v698
    %v700 = vpop.f32.mrb[0].mxu0
    %v701 = vadd.f32 %v212, %v700
    %702 = vmatprep.mubr.bf16.mxu0 %v185
    %703 = vmatmul.mubr.bf16.gmra.mrb[0].mxu0 %v184
    %v704 = vpop.f32.mrb[0].mxu0
    %v705 = vadd.f32 %v208, %v704
    %v706 = vpop.f32.mrb[0].mxu0
    %v707 = vadd.f32 %v212, %v706
    %v708 = vpop.f32.mrb[0].mxu0
    %v709 = vadd.f32 %v208, %v708
    %v710 = vpop.f32.mrb[0].mxu0
    %v711 = vadd.f32 %v212, %v710
    %712 = vmatprep.mubr.bf16.mxu0 %v187
    %713 = vmatmul.mubr.bf16.gmra.mrb[0].mxu0 %v186
    %v714 = vpop.f32.mrb[0].mxu0
    %v715 = vadd.f32 %v208, %v714
    %v716 = vpop.f32.mrb[0].mxu0
    %v717 = vadd.f32 %v212, %v716
    %v718 = vpop.f32.mrb[0].mxu0
    %v719 = vadd.f32 %v208, %v718
    %v720 = vpop.f32.mrb[0].mxu0
    %v721 = vadd.f32 %v212, %v720
    %722 = vmatprep.mubr.bf16.mxu0 %v189
    %723 = vmatmul.mubr.bf16.gmra.mrb[0].mxu0 %v188
    %v724 = vpop.f32.mrb[0].mxu0
    %v725 = vadd.f32 %v208, %v724
    %v726 = vpop.f32.mrb[0].mxu0
    %v727 = vadd.f32 %v212, %v726
    %v728 = vpop.f32.mrb[0].mxu0
    %v729 = vadd.f32 %v208, %v728
    %v730 = vpop.f32.mrb[0].mxu0
    %v731 = vadd.f32 %v212, %v730
    %732 = vmatprep.mubr.bf16.mxu0 %v191
    %733 = vmatmul.mubr.bf16.gmra.mrb[0].mxu0 %v190
    %v734 = vpop.f32.mrb[0].mxu0
    %v735 = vadd.f32 %v208, %v734
    %v736 = vpop.f32.mrb[0].mxu0
    %v737 = vadd.f32 %v212, %v736
    %v738 = vpop.f32.mrb[0].mxu0
    %v739 = vadd.f32 %v208, %v738
    %v740 = vpop.f32.mrb[0].mxu0
    %v741 = vadd.f32 %v212, %v740
    %742 = vmatprep.mubr.bf16.mxu0 %v193
    %743 = vmatmul.mubr.bf16.gmra.mrb[0].mxu0 %v192
    %v744 = vpop.f32.mrb[0].mxu0
    %v745 = vadd.f32 %v208, %v744
    %v746 = vpop.f32.mrb[0].mxu0
    %v747 = vadd.f32 %v212, %v746
    %v748 = vpop.f32.mrb[0].mxu0
    %v749 = vadd.f32 %v208, %v748
    %v750 = vpop.f32.mrb[0].mxu0
    %v751 = vadd.f32 %v212, %v750
    %752 = vmatprep.mubr.bf16.mxu0 %v195
    %753 = vmatmul.mubr.bf16.gmra.mrb[0].mxu0 %v194
    %v754 = vpop.f32.mrb[0].mxu0
    %v755 = vadd.f32 %v208, %v754
    %v756 = vpop.f32.mrb[0].mxu0
    %v757 = vadd.f32 %v212, %v756
    %v758 = vpop.f32.mrb[0].mxu0
    %v759 = vadd.f32 %v208, %v758
    %v760 = vpop.f32.mrb[0].mxu0
    %v761 = vadd.f32 %v212, %v760
    %762 = vdwg.mxu0
    %v763 = vmax.f32 %v572, 0.0
    %v764 = vmax.f32 %v574, 0.0
    %v765 = vmax.f32 %v685, 0.0
    %v766 = vmax.f32 %v687, 0.0
    %v767 = vmax.f32 %v576, 0.0
    %v768 = vmax.f32 %v578, 0.0
    %v769 = vmax.f32 %v689, 0.0
    %v770 = vmax.f32 %v691, 0.0
    %v771 = vmax.f32 %v582, 0.0
    %v772 = vmax.f32 %v584, 0.0
    %v773 = vmax.f32 %v695, 0.0
    %v774 = vmax.f32 %v697, 0.0
    %v775 = vmax.f32 %v586, 0.0
    %v776 = vmax.f32 %v588, 0.0
    %v777 = vmax.f32 %v699, 0.0
    %v778 = vmax.f32 %v701, 0.0
    %v779 = vmax.f32 %v592, 0.0
    %v780 = vmax.f32 %v594, 0.0
    %v781 = vmax.f32 %v705, 0.0
    %v782 = vmax.f32 %v707, 0.0
    %v783 = vmax.f32 %v596, 0.0
    %v784 = vmax.f32 %v598, 0.0
    %v785 = vmax.f32 %v709, 0.0
    %v786 = vmax.f32 %v711, 0.0
    %v787 = vmax.f32 %v602, 0.0
    %v788 = vmax.f32 %v604, 0.0
    %v789 = vmax.f32 %v715, 0.0
    %v790 = vmax.f32 %v717, 0.0
    %v791 = vmax.f32 %v606, 0.0
    %v792 = vmax.f32 %v608, 0.0
    %v793 = vmax.f32 %v719, 0.0
    %v794 = vmax.f32 %v721, 0.0
    %v795 = vmax.f32 %v612, 0.0
    %v796 = vmax.f32 %v614, 0.0
    %v797 = vmax.f32 %v725, 0.0
    %v798 = vmax.f32 %v727, 0.0
    %v799 = vmax.f32 %v616, 0.0
    %v800 = vmax.f32 %v618, 0.0
    %v801 = vmax.f32 %v729, 0.0
    %v802 = vmax.f32 %v731, 0.0
    %v803 = vmax.f32 %v622, 0.0
    %v804 = vmax.f32 %v624, 0.0
    %v805 = vmax.f32 %v735, 0.0
    %v806 = vmax.f32 %v737, 0.0
    %v807 = vmax.f32 %v626, 0.0
    %v808 = vmax.f32 %v628, 0.0
    %v809 = vmax.f32 %v739, 0.0
    %v810 = vmax.f32 %v741, 0.0
    %v811 = vmax.f32 %v632, 0.0
    %v812 = vmax.f32 %v634, 0.0
    %v813 = vmax.f32 %v745, 0.0
    %v814 = vmax.f32 %v747, 0.0
    %v815 = vmax.f32 %v636, 0.0
    %v816 = vmax.f32 %v638, 0.0
    %v817 = vmax.f32 %v749, 0.0
    %v818 = vmax.f32 %v751, 0.0
    %v819 = vmax.f32 %v642, 0.0
    %v820 = vmax.f32 %v644, 0.0
    %v821 = vmax.f32 %v755, 0.0
    %v822 = vmax.f32 %v757, 0.0
    %v823 = vmax.f32 %v646, 0.0
    %v824 = vmax.f32 %v648, 0.0
    %v825 = vmax.f32 %v759, 0.0
    %v826 = vmax.f32 %v761, 0.0
    %v827 = vld [vmem:[#allocation7] sm:$0xff]
    %v828 = vld [vmem:[#allocation7 + $0x8] sm:$0xff]
    %v829 = vld [vmem:[#allocation7 + $0x10] sm:$0xff]
    %v830 = vld [vmem:[#allocation7 + $0x18] sm:$0xff]
    %v831 = vld [vmem:[#allocation7 + $0x20] sm:$0xff]
    %v832 = vld [vmem:[#allocation7 + $0x28] sm:$0xff]
    %v833 = vld [vmem:[#allocation7 + $0x30] sm:$0xff]
    %v834 = vld [vmem:[#allocation7 + $0x38] sm:$0xff]
    %v835 = vld [vmem:[#allocation7 + $0x40] sm:$0xff]
    %v836 = vld [vmem:[#allocation7 + $0x48] sm:$0xff]
    %v837 = vld [vmem:[#allocation7 + $0x50] sm:$0xff]
    %v838 = vld [vmem:[#allocation7 + $0x58] sm:$0xff]
    %v839 = vld [vmem:[#allocation7 + $0x60] sm:$0xff]
    %v840 = vld [vmem:[#allocation7 + $0x68] sm:$0xff]
    %v841 = vld [vmem:[#allocation7 + $0x70] sm:$0xff]
    %v842 = vld [vmem:[#allocation7 + $0x78] sm:$0xff]
    %v843 = vld [vmem:[#allocation7 + $0x80] sm:$0xff]
    %v844 = vld [vmem:[#allocation7 + $0x88] sm:$0xff]
    %v845 = vld [vmem:[#allocation7 + $0x90] sm:$0xff]
    %v846 = vld [vmem:[#allocation7 + $0x98] sm:$0xff]
    %v847 = vld [vmem:[#allocation7 + $0xa0] sm:$0xff]
    %v848 = vld [vmem:[#allocation7 + $0xa8] sm:$0xff]
    %v849 = vld [vmem:[#allocation7 + $0xb0] sm:$0xff]
    %v850 = vld [vmem:[#allocation7 + $0xb8] sm:$0xff]
    %v851 = vld [vmem:[#allocation7 + $0xc0] sm:$0xff]
    %v852 = vld [vmem:[#allocation7 + $0xc8] sm:$0xff]
    %v853 = vld [vmem:[#allocation7 + $0xd0] sm:$0xff]
    %v854 = vld [vmem:[#allocation7 + $0xd8] sm:$0xff]
    %v855 = vld [vmem:[#allocation7 + $0xe0] sm:$0xff]
    %v856 = vld [vmem:[#allocation7 + $0xe8] sm:$0xff]
    %v857 = vld [vmem:[#allocation7 + $0xf0] sm:$0xff]
    %v858 = vld [vmem:[#allocation7 + $0xf8] sm:$0xff]
    %v859 = vld [vmem:[#allocation7 + $0x100] sm:$0xff]
    %v860 = vld [vmem:[#allocation7 + $0x108] sm:$0xff]
    %v861 = vld [vmem:[#allocation7 + $0x110] sm:$0xff]
    %v862 = vld [vmem:[#allocation7 + $0x118] sm:$0xff]
    %v863 = vld [vmem:[#allocation7 + $0x120] sm:$0xff]
    %v864 = vld [vmem:[#allocation7 + $0x128] sm:$0xff]
    %v865 = vld [vmem:[#allocation7 + $0x130] sm:$0xff]
    %v866 = vld [vmem:[#allocation7 + $0x138] sm:$0xff]
    %v867 = vld [vmem:[#allocation7 + $0x140] sm:$0xff]
    %v868 = vld [vmem:[#allocation7 + $0x148] sm:$0xff]
    %v869 = vld [vmem:[#allocation7 + $0x150] sm:$0xff]
    %v870 = vld [vmem:[#allocation7 + $0x158] sm:$0xff]
    %v871 = vld [vmem:[#allocation7 + $0x160] sm:$0xff]
    %v872 = vld [vmem:[#allocation7 + $0x168] sm:$0xff]
    %v873 = vld [vmem:[#allocation7 + $0x170] sm:$0xff]
    %v874 = vld [vmem:[#allocation7 + $0x178] sm:$0xff]
    %v875 = vld [vmem:[#allocation7 + $0x180] sm:$0xff]
    %v876 = vld [vmem:[#allocation7 + $0x188] sm:$0xff]
    %v877 = vld [vmem:[#allocation7 + $0x190] sm:$0xff]
    %v878 = vld [vmem:[#allocation7 + $0x198] sm:$0xff]
    %v879 = vld [vmem:[#allocation7 + $0x1a0] sm:$0xff]
    %v880 = vld [vmem:[#allocation7 + $0x1a8] sm:$0xff]
    %v881 = vld [vmem:[#allocation7 + $0x1b0] sm:$0xff]
    %v882 = vld [vmem:[#allocation7 + $0x1b8] sm:$0xff]
    %v883 = vld [vmem:[#allocation7 + $0x1c0] sm:$0xff]
    %v884 = vld [vmem:[#allocation7 + $0x1c8] sm:$0xff]
    %v885 = vld [vmem:[#allocation7 + $0x1d0] sm:$0xff]
    %v886 = vld [vmem:[#allocation7 + $0x1d8] sm:$0xff]
    %v887 = vld [vmem:[#allocation7 + $0x1e0] sm:$0xff]
    %v888 = vld [vmem:[#allocation7 + $0x1e8] sm:$0xff]
    %v889 = vld [vmem:[#allocation7 + $0x1f0] sm:$0xff]
    %v890 = vld [vmem:[#allocation7 + $0x1f8] sm:$0xff]
    %v891 = vld [vmem:[#allocation7 + $0x200] sm:$0xff]
    %v892 = vld [vmem:[#allocation7 + $0x208] sm:$0xff]
    %v893 = vld [vmem:[#allocation7 + $0x210] sm:$0xff]
    %v894 = vld [vmem:[#allocation7 + $0x218] sm:$0xff]
    %v895 = vld [vmem:[#allocation7 + $0x220] sm:$0xff]
    %v896 = vld [vmem:[#allocation7 + $0x228] sm:$0xff]
    %v897 = vld [vmem:[#allocation7 + $0x230] sm:$0xff]
    %v898 = vld [vmem:[#allocation7 + $0x238] sm:$0xff]
    %v899 = vld [vmem:[#allocation7 + $0x240] sm:$0xff]
    %v900 = vld [vmem:[#allocation7 + $0x248] sm:$0xff]
    %v901 = vld [vmem:[#allocation7 + $0x250] sm:$0xff]
    %v902 = vld [vmem:[#allocation7 + $0x258] sm:$0xff]
    %v903 = vld [vmem:[#allocation7 + $0x260] sm:$0xff]
    %v904 = vld [vmem:[#allocation7 + $0x268] sm:$0xff]
    %v905 = vld [vmem:[#allocation7 + $0x270] sm:$0xff]
    %v906 = vld [vmem:[#allocation7 + $0x278] sm:$0xff]
    %v907 = vld [vmem:[#allocation7 + $0x280] sm:$0xff]
    %v908 = vld [vmem:[#allocation7 + $0x288] sm:$0xff]
    %v909 = vld [vmem:[#allocation7 + $0x290] sm:$0xff]
    %v910 = vld [vmem:[#allocation7 + $0x298] sm:$0xff]
    %v911 = vld [vmem:[#allocation7 + $0x2a0] sm:$0xff]
    %v912 = vld [vmem:[#allocation7 + $0x2a8] sm:$0xff]
    %v913 = vld [vmem:[#allocation7 + $0x2b0] sm:$0xff]
    %v914 = vld [vmem:[#allocation7 + $0x2b8] sm:$0xff]
    %v915 = vld [vmem:[#allocation7 + $0x2c0] sm:$0xff]
    %v916 = vld [vmem:[#allocation7 + $0x2c8] sm:$0xff]
    %v917 = vld [vmem:[#allocation7 + $0x2d0] sm:$0xff]
    %v918 = vld [vmem:[#allocation7 + $0x2d8] sm:$0xff]
    %v919 = vld [vmem:[#allocation7 + $0x2e0] sm:$0xff]
    %v920 = vld [vmem:[#allocation7 + $0x2e8] sm:$0xff]
    %v921 = vld [vmem:[#allocation7 + $0x2f0] sm:$0xff]
    %v922 = vld [vmem:[#allocation7 + $0x2f8] sm:$0xff]
    %v923 = vld [vmem:[#allocation7 + $0x300] sm:$0xff]
    %v924 = vld [vmem:[#allocation7 + $0x308] sm:$0xff]
    %v925 = vld [vmem:[#allocation7 + $0x310] sm:$0xff]
    %v926 = vld [vmem:[#allocation7 + $0x318] sm:$0xff]
    %v927 = vld [vmem:[#allocation7 + $0x320] sm:$0xff]
    %v928 = vld [vmem:[#allocation7 + $0x328] sm:$0xff]
    %v929 = vld [vmem:[#allocation7 + $0x330] sm:$0xff]
    %v930 = vld [vmem:[#allocation7 + $0x338] sm:$0xff]
    %v931 = vld [vmem:[#allocation7 + $0x340] sm:$0xff]
    %v932 = vld [vmem:[#allocation7 + $0x348] sm:$0xff]
    %v933 = vld [vmem:[#allocation7 + $0x350] sm:$0xff]
    %v934 = vld [vmem:[#allocation7 + $0x358] sm:$0xff]
    %v935 = vld [vmem:[#allocation7 + $0x360] sm:$0xff]
    %v936 = vld [vmem:[#allocation7 + $0x368] sm:$0xff]
    %v937 = vld [vmem:[#allocation7 + $0x370] sm:$0xff]
    %v938 = vld [vmem:[#allocation7 + $0x378] sm:$0xff]
    %v939 = vld [vmem:[#allocation7 + $0x380] sm:$0xff]
    %v940 = vld [vmem:[#allocation7 + $0x388] sm:$0xff]
    %v941 = vld [vmem:[#allocation7 + $0x390] sm:$0xff]
    %v942 = vld [vmem:[#allocation7 + $0x398] sm:$0xff]
    %v943 = vld [vmem:[#allocation7 + $0x3a0] sm:$0xff]
    %v944 = vld [vmem:[#allocation7 + $0x3a8] sm:$0xff]
    %v945 = vld [vmem:[#allocation7 + $0x3b0] sm:$0xff]
    %v946 = vld [vmem:[#allocation7 + $0x3b8] sm:$0xff]
    %v947 = vld [vmem:[#allocation7 + $0x3c0] sm:$0xff]
    %v948 = vld [vmem:[#allocation7 + $0x3c8] sm:$0xff]
    %v949 = vld [vmem:[#allocation7 + $0x3d0] sm:$0xff]
    %v950 = vld [vmem:[#allocation7 + $0x3d8] sm:$0xff]
    %v951 = vld [vmem:[#allocation7 + $0x3e0] sm:$0xff]
    %v952 = vld [vmem:[#allocation7 + $0x3e8] sm:$0xff]
    %v953 = vld [vmem:[#allocation7 + $0x3f0] sm:$0xff]
    %v954 = vld [vmem:[#allocation7 + $0x3f8] sm:$0xff]
    %v955 = vld [vmem:[%s4] sm:$0xf]
    %v956 = vpack.c.bf16 %v767, %v763
    %v957 = vpack.c.bf16 %v768, %v764
    %v958 = vpack.c.bf16 %v769, %v765
    %v959 = vpack.c.bf16 %v770, %v766
    %v960 = vpack.c.bf16 %v775, %v771
    %v961 = vpack.c.bf16 %v776, %v772
    %v962 = vpack.c.bf16 %v777, %v773
    %v963 = vpack.c.bf16 %v778, %v774
    %v964 = vpack.c.bf16 %v783, %v779
    %v965 = vpack.c.bf16 %v784, %v780
    %v966 = vpack.c.bf16 %v785, %v781
    %v967 = vpack.c.bf16 %v786, %v782
    %v968 = vpack.c.bf16 %v791, %v787
    %v969 = vpack.c.bf16 %v792, %v788
    %v970 = vpack.c.bf16 %v793, %v789
    %v971 = vpack.c.bf16 %v794, %v790
    %v972 = vpack.c.bf16 %v799, %v795
    %v973 = vpack.c.bf16 %v800, %v796
    %v974 = vpack.c.bf16 %v801, %v797
    %v975 = vpack.c.bf16 %v802, %v798
    %v976 = vpack.c.bf16 %v807, %v803
    %v977 = vpack.c.bf16 %v808, %v804
    %v978 = vpack.c.bf16 %v809, %v805
    %v979 = vpack.c.bf16 %v810, %v806
    %v980 = vpack.c.bf16 %v815, %v811
    %v981 = vpack.c.bf16 %v816, %v812
    %v982 = vpack.c.bf16 %v817, %v813
    %v983 = vpack.c.bf16 %v818, %v814
    %v984 = vpack.c.bf16 %v823, %v819
    %v985 = vpack.c.bf16 %v824, %v820
    %v986 = vpack.c.bf16 %v825, %v821
    %v987 = vpack.c.bf16 %v826, %v822
    %v989 = vlaneseq
    %v990 = vshrl.u32 %v989, 7
    %v991 = vsub.s32 0, %v990
    %v992 = vrot.slane %v955, %v991
    %v993 = vlaneseq
    %v994 = vshrl.u32 %v993, 7
    %v995 = vsub.s32 1, %v994
    %v996 = vrot.slane %v955, %v995
    %v997 = vlaneseq
    %v998 = vshrl.u32 %v997, 7
    %v999 = vsub.s32 2, %v998
    %v1000 = vrot.slane %v955, %v999
    %v1001 = vlaneseq
    %v1002 = vshrl.u32 %v1001, 7
    %v1003 = vsub.s32 3, %v1002
    %v1004 = vrot.slane %v955, %v1003
    %v1137 = vunpack.c.l.b16 %v827
    %v1138 = vunpack.c.h.b16 %v827
    %v1139 = vunpack.c.l.b16 %v828
    %v1140 = vunpack.c.h.b16 %v828
    %v1141 = vunpack.c.l.b16 %v829
    %v1142 = vunpack.c.h.b16 %v829
    %v1143 = vunpack.c.l.b16 %v830
    %v1144 = vunpack.c.h.b16 %v830
    %v1145 = vunpack.c.l.b16 %v831
    %v1146 = vunpack.c.h.b16 %v831
    %v1147 = vunpack.c.l.b16 %v832
    %v1148 = vunpack.c.h.b16 %v832
    %v1149 = vunpack.c.l.b16 %v833
    %v1150 = vunpack.c.h.b16 %v833
    %v1151 = vunpack.c.l.b16 %v834
    %v1152 = vunpack.c.h.b16 %v834
    %v1153 = vunpack.c.l.b16 %v835
    %v1154 = vunpack.c.h.b16 %v835
    %v1155 = vunpack.c.l.b16 %v836
    %v1156 = vunpack.c.h.b16 %v836
    %v1157 = vunpack.c.l.b16 %v837
    %v1158 = vunpack.c.h.b16 %v837
    %v1159 = vunpack.c.l.b16 %v838
    %v1160 = vunpack.c.h.b16 %v838
    %v1161 = vunpack.c.l.b16 %v839
    %v1162 = vunpack.c.h.b16 %v839
    %v1163 = vunpack.c.l.b16 %v840
    %v1164 = vunpack.c.h.b16 %v840
    %v1165 = vunpack.c.l.b16 %v841
    %v1166 = vunpack.c.h.b16 %v841
    %v1167 = vunpack.c.l.b16 %v842
    %v1168 = vunpack.c.h.b16 %v842
    %v1169 = vunpack.c.l.b16 %v843
    %v1170 = vunpack.c.h.b16 %v843
    %v1171 = vunpack.c.l.b16 %v844
    %v1172 = vunpack.c.h.b16 %v844
    %v1173 = vunpack.c.l.b16 %v845
    %v1174 = vunpack.c.h.b16 %v845
    %v1175 = vunpack.c.l.b16 %v846
    %v1176 = vunpack.c.h.b16 %v846
    %v1177 = vunpack.c.l.b16 %v847
    %v1178 = vunpack.c.h.b16 %v847
    %v1179 = vunpack.c.l.b16 %v848
    %v1180 = vunpack.c.h.b16 %v848
    %v1181 = vunpack.c.l.b16 %v849
    %v1182 = vunpack.c.h.b16 %v849
    %v1183 = vunpack.c.l.b16 %v850
    %v1184 = vunpack.c.h.b16 %v850
    %v1185 = vunpack.c.l.b16 %v851
    %v1186 = vunpack.c.h.b16 %v851
    %v1187 = vunpack.c.l.b16 %v852
    %v1188 = vunpack.c.h.b16 %v852
    %v1189 = vunpack.c.l.b16 %v853
    %v1190 = vunpack.c.h.b16 %v853
    %v1191 = vunpack.c.l.b16 %v854
    %v1192 = vunpack.c.h.b16 %v854
    %v1193 = vunpack.c.l.b16 %v855
    %v1194 = vunpack.c.h.b16 %v855
    %v1195 = vunpack.c.l.b16 %v856
    %v1196 = vunpack.c.h.b16 %v856
    %v1197 = vunpack.c.l.b16 %v857
    %v1198 = vunpack.c.h.b16 %v857
    %v1199 = vunpack.c.l.b16 %v858
    %v1200 = vunpack.c.h.b16 %v858
    %v1201 = vunpack.c.l.b16 %v859
    %v1202 = vunpack.c.h.b16 %v859
    %v1203 = vunpack.c.l.b16 %v860
    %v1204 = vunpack.c.h.b16 %v860
    %v1205 = vunpack.c.l.b16 %v861
    %v1206 = vunpack.c.h.b16 %v861
    %v1207 = vunpack.c.l.b16 %v862
    %v1208 = vunpack.c.h.b16 %v862
    %v1209 = vunpack.c.l.b16 %v863
    %v1210 = vunpack.c.h.b16 %v863
    %v1211 = vunpack.c.l.b16 %v864
    %v1212 = vunpack.c.h.b16 %v864
    %v1213 = vunpack.c.l.b16 %v865
    %v1214 = vunpack.c.h.b16 %v865
    %v1215 = vunpack.c.l.b16 %v866
    %v1216 = vunpack.c.h.b16 %v866
    %v1217 = vunpack.c.l.b16 %v867
    %v1218 = vunpack.c.h.b16 %v867
    %v1219 = vunpack.c.l.b16 %v868
    %v1220 = vunpack.c.h.b16 %v868
    %v1221 = vunpack.c.l.b16 %v869
    %v1222 = vunpack.c.h.b16 %v869
    %v1223 = vunpack.c.l.b16 %v870
    %v1224 = vunpack.c.h.b16 %v870
    %v1225 = vunpack.c.l.b16 %v871
    %v1226 = vunpack.c.h.b16 %v871
    %v1227 = vunpack.c.l.b16 %v872
    %v1228 = vunpack.c.h.b16 %v872
    %v1229 = vunpack.c.l.b16 %v873
    %v1230 = vunpack.c.h.b16 %v873
    %v1231 = vunpack.c.l.b16 %v874
    %v1232 = vunpack.c.h.b16 %v874
    %v1233 = vunpack.c.l.b16 %v875
    %v1234 = vunpack.c.h.b16 %v875
    %v1235 = vunpack.c.l.b16 %v876
    %v1236 = vunpack.c.h.b16 %v876
    %v1237 = vunpack.c.l.b16 %v877
    %v1238 = vunpack.c.h.b16 %v877
    %v1239 = vunpack.c.l.b16 %v878
    %v1240 = vunpack.c.h.b16 %v878
    %v1241 = vunpack.c.l.b16 %v879
    %v1242 = vunpack.c.h.b16 %v879
    %v1243 = vunpack.c.l.b16 %v880
    %v1244 = vunpack.c.h.b16 %v880
    %v1245 = vunpack.c.l.b16 %v881
    %v1246 = vunpack.c.h.b16 %v881
    %v1247 = vunpack.c.l.b16 %v882
    %v1248 = vunpack.c.h.b16 %v882
    %v1249 = vunpack.c.l.b16 %v883
    %v1250 = vunpack.c.h.b16 %v883
    %v1251 = vunpack.c.l.b16 %v884
    %v1252 = vunpack.c.h.b16 %v884
    %v1253 = vunpack.c.l.b16 %v885
    %v1254 = vunpack.c.h.b16 %v885
    %v1255 = vunpack.c.l.b16 %v886
    %v1256 = vunpack.c.h.b16 %v886
    %v1257 = vunpack.c.l.b16 %v887
    %v1258 = vunpack.c.h.b16 %v887
    %v1259 = vunpack.c.l.b16 %v888
    %v1260 = vunpack.c.h.b16 %v888
    %v1261 = vunpack.c.l.b16 %v889
    %v1262 = vunpack.c.h.b16 %v889
    %v1263 = vunpack.c.l.b16 %v890
    %v1264 = vunpack.c.h.b16 %v890
    %v1265 = vunpack.c.l.b16 %v891
    %v1266 = vunpack.c.h.b16 %v891
    %v1267 = vunpack.c.l.b16 %v892
    %v1268 = vunpack.c.h.b16 %v892
    %v1269 = vunpack.c.l.b16 %v893
    %v1270 = vunpack.c.h.b16 %v893
    %v1271 = vunpack.c.l.b16 %v894
    %v1272 = vunpack.c.h.b16 %v894
    %v1273 = vunpack.c.l.b16 %v895
    %v1274 = vunpack.c.h.b16 %v895
    %v1275 = vunpack.c.l.b16 %v896
    %v1276 = vunpack.c.h.b16 %v896
    %v1277 = vunpack.c.l.b16 %v897
    %v1278 = vunpack.c.h.b16 %v897
    %v1279 = vunpack.c.l.b16 %v898
    %v1280 = vunpack.c.h.b16 %v898
    %v1281 = vunpack.c.l.b16 %v899
    %v1282 = vunpack.c.h.b16 %v899
    %v1283 = vunpack.c.l.b16 %v900
    %v1284 = vunpack.c.h.b16 %v900
    %v1285 = vunpack.c.l.b16 %v901
    %v1286 = vunpack.c.h.b16 %v901
    %v1287 = vunpack.c.l.b16 %v902
    %v1288 = vunpack.c.h.b16 %v902
    %v1289 = vunpack.c.l.b16 %v903
    %v1290 = vunpack.c.h.b16 %v903
    %v1291 = vunpack.c.l.b16 %v904
    %v1292 = vunpack.c.h.b16 %v904
    %v1293 = vunpack.c.l.b16 %v905
    %v1294 = vunpack.c.h.b16 %v905
    %v1295 = vunpack.c.l.b16 %v906
    %v1296 = vunpack.c.h.b16 %v906
    %v1297 = vunpack.c.l.b16 %v907
    %v1298 = vunpack.c.h.b16 %v907
    %v1299 = vunpack.c.l.b16 %v908
    %v1300 = vunpack.c.h.b16 %v908
    %v1301 = vunpack.c.l.b16 %v909
    %v1302 = vunpack.c.h.b16 %v909
    %v1303 = vunpack.c.l.b16 %v910
    %v1304 = vunpack.c.h.b16 %v910
    %v1305 = vunpack.c.l.b16 %v911
    %v1306 = vunpack.c.h.b16 %v911
    %v1307 = vunpack.c.l.b16 %v912
    %v1308 = vunpack.c.h.b16 %v912
    %v1309 = vunpack.c.l.b16 %v913
    %v1310 = vunpack.c.h.b16 %v913
    %v1311 = vunpack.c.l.b16 %v914
    %v1312 = vunpack.c.h.b16 %v914
    %v1313 = vunpack.c.l.b16 %v915
    %v1314 = vunpack.c.h.b16 %v915
    %v1315 = vunpack.c.l.b16 %v916
    %v1316 = vunpack.c.h.b16 %v916
    %v1317 = vunpack.c.l.b16 %v917
    %v1318 = vunpack.c.h.b16 %v917
    %v1319 = vunpack.c.l.b16 %v918
    %v1320 = vunpack.c.h.b16 %v918
    %v1321 = vunpack.c.l.b16 %v919
    %v1322 = vunpack.c.h.b16 %v919
    %v1323 = vunpack.c.l.b16 %v920
    %v1324 = vunpack.c.h.b16 %v920
    %v1325 = vunpack.c.l.b16 %v921
    %v1326 = vunpack.c.h.b16 %v921
    %v1327 = vunpack.c.l.b16 %v922
    %v1328 = vunpack.c.h.b16 %v922
    %v1329 = vunpack.c.l.b16 %v923
    %v1330 = vunpack.c.h.b16 %v923
    %v1331 = vunpack.c.l.b16 %v924
    %v1332 = vunpack.c.h.b16 %v924
    %v1333 = vunpack.c.l.b16 %v925
    %v1334 = vunpack.c.h.b16 %v925
    %v1335 = vunpack.c.l.b16 %v926
    %v1336 = vunpack.c.h.b16 %v926
    %v1337 = vunpack.c.l.b16 %v927
    %v1338 = vunpack.c.h.b16 %v927
    %v1339 = vunpack.c.l.b16 %v928
    %v1340 = vunpack.c.h.b16 %v928
    %v1341 = vunpack.c.l.b16 %v929
    %v1342 = vunpack.c.h.b16 %v929
    %v1343 = vunpack.c.l.b16 %v930
    %v1344 = vunpack.c.h.b16 %v930
    %v1345 = vunpack.c.l.b16 %v931
    %v1346 = vunpack.c.h.b16 %v931
    %v1347 = vunpack.c.l.b16 %v932
    %v1348 = vunpack.c.h.b16 %v932
    %v1349 = vunpack.c.l.b16 %v933
    %v1350 = vunpack.c.h.b16 %v933
    %v1351 = vunpack.c.l.b16 %v934
    %v1352 = vunpack.c.h.b16 %v934
    %v1353 = vunpack.c.l.b16 %v935
    %v1354 = vunpack.c.h.b16 %v935
    %v1355 = vunpack.c.l.b16 %v936
    %v1356 = vunpack.c.h.b16 %v936
    %v1357 = vunpack.c.l.b16 %v937
    %v1358 = vunpack.c.h.b16 %v937
    %v1359 = vunpack.c.l.b16 %v938
    %v1360 = vunpack.c.h.b16 %v938
    %v1361 = vunpack.c.l.b16 %v939
    %v1362 = vunpack.c.h.b16 %v939
    %v1363 = vunpack.c.l.b16 %v940
    %v1364 = vunpack.c.h.b16 %v940
    %v1365 = vunpack.c.l.b16 %v941
    %v1366 = vunpack.c.h.b16 %v941
    %v1367 = vunpack.c.l.b16 %v942
    %v1368 = vunpack.c.h.b16 %v942
    %v1369 = vunpack.c.l.b16 %v943
    %v1370 = vunpack.c.h.b16 %v943
    %v1371 = vunpack.c.l.b16 %v944
    %v1372 = vunpack.c.h.b16 %v944
    %v1373 = vunpack.c.l.b16 %v945
    %v1374 = vunpack.c.h.b16 %v945
    %v1375 = vunpack.c.l.b16 %v946
    %v1376 = vunpack.c.h.b16 %v946
    %v1377 = vunpack.c.l.b16 %v947
    %v1378 = vunpack.c.h.b16 %v947
    %v1379 = vunpack.c.l.b16 %v948
    %v1380 = vunpack.c.h.b16 %v948
    %v1381 = vunpack.c.l.b16 %v949
    %v1382 = vunpack.c.h.b16 %v949
    %v1383 = vunpack.c.l.b16 %v950
    %v1384 = vunpack.c.h.b16 %v950
    %v1385 = vunpack.c.l.b16 %v951
    %v1386 = vunpack.c.h.b16 %v951
    %v1387 = vunpack.c.l.b16 %v952
    %v1388 = vunpack.c.h.b16 %v952
    %v1389 = vunpack.c.l.b16 %v953
    %v1390 = vunpack.c.h.b16 %v953
    %v1391 = vunpack.c.l.b16 %v954
    %v1392 = vunpack.c.h.b16 %v954
    %v1393 = vpack.c.b16 %v1141, %v1137
    %v1394 = vpack.c.b16 %v1142, %v1138
    %v1395 = vpack.c.b16 %v1143, %v1139
    %v1396 = vpack.c.b16 %v1144, %v1140
    %v1397 = vpack.c.b16 %v1149, %v1145
    %v1398 = vpack.c.b16 %v1150, %v1146
    %v1399 = vpack.c.b16 %v1151, %v1147
    %v1400 = vpack.c.b16 %v1152, %v1148
    %v1401 = vpack.c.b16 %v1157, %v1153
    %v1402 = vpack.c.b16 %v1158, %v1154
    %v1403 = vpack.c.b16 %v1159, %v1155
    %v1404 = vpack.c.b16 %v1160, %v1156
    %v1405 = vpack.c.b16 %v1165, %v1161
    %v1406 = vpack.c.b16 %v1166, %v1162
    %v1407 = vpack.c.b16 %v1167, %v1163
    %v1408 = vpack.c.b16 %v1168, %v1164
    %v1409 = vpack.c.b16 %v1173, %v1169
    %v1410 = vpack.c.b16 %v1174, %v1170
    %v1411 = vpack.c.b16 %v1175, %v1171
    %v1412 = vpack.c.b16 %v1176, %v1172
    %v1413 = vpack.c.b16 %v1181, %v1177
    %v1414 = vpack.c.b16 %v1182, %v1178
    %v1415 = vpack.c.b16 %v1183, %v1179
    %v1416 = vpack.c.b16 %v1184, %v1180
    %v1417 = vpack.c.b16 %v1189, %v1185
    %v1418 = vpack.c.b16 %v1190, %v1186
    %v1419 = vpack.c.b16 %v1191, %v1187
    %v1420 = vpack.c.b16 %v1192, %v1188
    %v1421 = vpack.c.b16 %v1197, %v1193
    %v1422 = vpack.c.b16 %v1198, %v1194
    %v1423 = vpack.c.b16 %v1199, %v1195
    %v1424 = vpack.c.b16 %v1200, %v1196
    %v1425 = vpack.c.b16 %v1205, %v1201
    %v1426 = vpack.c.b16 %v1206, %v1202
    %v1427 = vpack.c.b16 %v1207, %v1203
    %v1428 = vpack.c.b16 %v1208, %v1204
    %v1429 = vpack.c.b16 %v1213, %v1209
    %v1430 = vpack.c.b16 %v1214, %v1210
    %v1431 = vpack.c.b16 %v1215, %v1211
    %v1432 = vpack.c.b16 %v1216, %v1212
    %v1433 = vpack.c.b16 %v1221, %v1217
    %v1434 = vpack.c.b16 %v1222, %v1218
    %v1435 = vpack.c.b16 %v1223, %v1219
    %v1436 = vpack.c.b16 %v1224, %v1220
    %v1437 = vpack.c.b16 %v1229, %v1225
    %v1438 = vpack.c.b16 %v1230, %v1226
    %v1439 = vpack.c.b16 %v1231, %v1227
    %v1440 = vpack.c.b16 %v1232, %v1228
    %v1441 = vpack.c.b16 %v1237, %v1233
    %v1442 = vpack.c.b16 %v1238, %v1234
    %v1443 = vpack.c.b16 %v1239, %v1235
    %v1444 = vpack.c.b16 %v1240, %v1236
    %v1445 = vpack.c.b16 %v1245, %v1241
    %v1446 = vpack.c.b16 %v1246, %v1242
    %v1447 = vpack.c.b16 %v1247, %v1243
    %v1448 = vpack.c.b16 %v1248, %v1244
    %v1449 = vpack.c.b16 %v1253, %v1249
    %v1450 = vpack.c.b16 %v1254, %v1250
    %v1451 = vpack.c.b16 %v1255, %v1251
    %v1452 = vpack.c.b16 %v1256, %v1252
    %v1453 = vpack.c.b16 %v1261, %v1257
    %v1454 = vpack.c.b16 %v1262, %v1258
    %v1455 = vpack.c.b16 %v1263, %v1259
    %v1456 = vpack.c.b16 %v1264, %v1260
    %v1457 = vpack.c.b16 %v1269, %v1265
    %v1458 = vpack.c.b16 %v1270, %v1266
    %v1459 = vpack.c.b16 %v1271, %v1267
    %v1460 = vpack.c.b16 %v1272, %v1268
    %v1461 = vpack.c.b16 %v1277, %v1273
    %v1462 = vpack.c.b16 %v1278, %v1274
    %v1463 = vpack.c.b16 %v1279, %v1275
    %v1464 = vpack.c.b16 %v1280, %v1276
    %v1465 = vpack.c.b16 %v1285, %v1281
    %v1466 = vpack.c.b16 %v1286, %v1282
    %v1467 = vpack.c.b16 %v1287, %v1283
    %v1468 = vpack.c.b16 %v1288, %v1284
    %v1469 = vpack.c.b16 %v1293, %v1289
    %v1470 = vpack.c.b16 %v1294, %v1290
    %v1471 = vpack.c.b16 %v1295, %v1291
    %v1472 = vpack.c.b16 %v1296, %v1292
    %v1473 = vpack.c.b16 %v1301, %v1297
    %v1474 = vpack.c.b16 %v1302, %v1298
    %v1475 = vpack.c.b16 %v1303, %v1299
    %v1476 = vpack.c.b16 %v1304, %v1300
    %v1477 = vpack.c.b16 %v1309, %v1305
    %v1478 = vpack.c.b16 %v1310, %v1306
    %v1479 = vpack.c.b16 %v1311, %v1307
    %v1480 = vpack.c.b16 %v1312, %v1308
    %v1481 = vpack.c.b16 %v1317, %v1313
    %v1482 = vpack.c.b16 %v1318, %v1314
    %v1483 = vpack.c.b16 %v1319, %v1315
    %v1484 = vpack.c.b16 %v1320, %v1316
    %v1485 = vpack.c.b16 %v1325, %v1321
    %v1486 = vpack.c.b16 %v1326, %v1322
    %v1487 = vpack.c.b16 %v1327, %v1323
    %v1488 = vpack.c.b16 %v1328, %v1324
    %v1489 = vpack.c.b16 %v1333, %v1329
    %v1490 = vpack.c.b16 %v1334, %v1330
    %v1491 = vpack.c.b16 %v1335, %v1331
    %v1492 = vpack.c.b16 %v1336, %v1332
    %v1493 = vpack.c.b16 %v1341, %v1337
    %v1494 = vpack.c.b16 %v1342, %v1338
    %v1495 = vpack.c.b16 %v1343, %v1339
    %v1496 = vpack.c.b16 %v1344, %v1340
    %v1497 = vpack.c.b16 %v1349, %v1345
    %v1498 = vpack.c.b16 %v1350, %v1346
    %v1499 = vpack.c.b16 %v1351, %v1347
    %v1500 = vpack.c.b16 %v1352, %v1348
    %v1501 = vpack.c.b16 %v1357, %v1353
    %v1502 = vpack.c.b16 %v1358, %v1354
    %v1503 = vpack.c.b16 %v1359, %v1355
    %v1504 = vpack.c.b16 %v1360, %v1356
    %v1505 = vpack.c.b16 %v1365, %v1361
    %v1506 = vpack.c.b16 %v1366, %v1362
    %v1507 = vpack.c.b16 %v1367, %v1363
    %v1508 = vpack.c.b16 %v1368, %v1364
    %v1509 = vpack.c.b16 %v1373, %v1369
    %v1510 = vpack.c.b16 %v1374, %v1370
    %v1511 = vpack.c.b16 %v1375, %v1371
    %v1512 = vpack.c.b16 %v1376, %v1372
    %v1513 = vpack.c.b16 %v1381, %v1377
    %v1514 = vpack.c.b16 %v1382, %v1378
    %v1515 = vpack.c.b16 %v1383, %v1379
    %v1516 = vpack.c.b16 %v1384, %v1380
    %v1517 = vpack.c.b16 %v1389, %v1385
    %v1518 = vpack.c.b16 %v1390, %v1386
    %v1519 = vpack.c.b16 %v1391, %v1387
    %v1520 = vpack.c.b16 %v1392, %v1388
    %1649 = vmatprep.subr.bf16.mxu0 %v1394
    %1650 = vmatpush1.bf16.msra.mxu0 %v1393
    %1651 = vmatprep.subr.bf16.mxu0 %v1398
    %1652 = vmatpush1.bf16.msra.mxu0 %v1397
    %1653 = vmatprep.subr.bf16.mxu0 %v1402
    %1654 = vmatpush1.bf16.msra.mxu0 %v1401
    %1655 = vmatprep.subr.bf16.mxu0 %v1406
    %1656 = vmatpush1.bf16.msra.mxu0 %v1405
    %1657 = vmatprep.subr.bf16.mxu0 %v1410
    %1658 = vmatpush1.bf16.msra.mxu0 %v1409
    %1659 = vmatprep.subr.bf16.mxu0 %v1414
    %1660 = vmatpush1.bf16.msra.mxu0 %v1413
    %1661 = vmatprep.subr.bf16.mxu0 %v1418
    %1662 = vmatpush1.bf16.msra.mxu0 %v1417
    %1663 = vmatprep.subr.bf16.mxu0 %v1422
    %1664 = vmatpush1.bf16.msra.mxu0 %v1421
    %1665 = vmatprep.subr.bf16.mxu0 %v1426
    %1666 = vmatpush1.bf16.msra.mxu0 %v1425
    %1667 = vmatprep.subr.bf16.mxu0 %v1430
    %1668 = vmatpush1.bf16.msra.mxu0 %v1429
    %1669 = vmatprep.subr.bf16.mxu0 %v1434
    %1670 = vmatpush1.bf16.msra.mxu0 %v1433
    %1671 = vmatprep.subr.bf16.mxu0 %v1438
    %1672 = vmatpush1.bf16.msra.mxu0 %v1437
    %1673 = vmatprep.subr.bf16.mxu0 %v1442
    %1674 = vmatpush1.bf16.msra.mxu0 %v1441
    %1675 = vmatprep.subr.bf16.mxu0 %v1446
    %1676 = vmatpush1.bf16.msra.mxu0 %v1445
    %1677 = vmatprep.subr.bf16.mxu0 %v1450
    %1678 = vmatpush1.bf16.msra.mxu0 %v1449
    %1679 = vmatprep.subr.bf16.mxu0 %v1454
    %1680 = vmatpush1.bf16.msra.mxu0 %v1453
    %1681 = vmatprep.mubr.bf16.mxu0 %v957
    %1682 = vmatmul.mubr.bf16.gmra.mrb[0].mxu0 %v956
    %v1683 = vpop.f32.mrb[0].mxu0
    %v1684 = vadd.f32 %v992, %v1683
    %v1685 = vpop.f32.mrb[0].mxu0
    %v1686 = vadd.f32 %v996, %v1685
    %v1687 = vpop.f32.mrb[0].mxu0
    %v1688 = vadd.f32 %v992, %v1687
    %v1689 = vpop.f32.mrb[0].mxu0
    %v1690 = vadd.f32 %v996, %v1689
    %1691 = vmatprep.mubr.bf16.mxu0 %v961
    %1692 = vmatmul.mubr.bf16.gmra.mrb[0].mxu0 %v960
    %v1693 = vpop.f32.mrb[0].mxu0
    %v1694 = vadd.f32 %v992, %v1693
    %v1695 = vpop.f32.mrb[0].mxu0
    %v1696 = vadd.f32 %v996, %v1695
    %v1697 = vpop.f32.mrb[0].mxu0
    %v1698 = vadd.f32 %v992, %v1697
    %v1699 = vpop.f32.mrb[0].mxu0
    %v1700 = vadd.f32 %v996, %v1699
    %1701 = vmatprep.mubr.bf16.mxu0 %v965
    %1702 = vmatmul.mubr.bf16.gmra.mrb[0].mxu0 %v964
    %v1703 = vpop.f32.mrb[0].mxu0
    %v1704 = vadd.f32 %v992, %v1703
    %v1705 = vpop.f32.mrb[0].mxu0
    %v1706 = vadd.f32 %v996, %v1705
    %v1707 = vpop.f32.mrb[0].mxu0
    %v1708 = vadd.f32 %v992, %v1707
    %v1709 = vpop.f32.mrb[0].mxu0
    %v1710 = vadd.f32 %v996, %v1709
    %1711 = vmatprep.mubr.bf16.mxu0 %v969
    %1712 = vmatmul.mubr.bf16.gmra.mrb[0].mxu0 %v968
    %v1713 = vpop.f32.mrb[0].mxu0
    %v1714 = vadd.f32 %v992, %v1713
    %v1715 = vpop.f32.mrb[0].mxu0
    %v1716 = vadd.f32 %v996, %v1715
    %v1717 = vpop.f32.mrb[0].mxu0
    %v1718 = vadd.f32 %v992, %v1717
    %v1719 = vpop.f32.mrb[0].mxu0
    %v1720 = vadd.f32 %v996, %v1719
    %1721 = vmatprep.mubr.bf16.mxu0 %v973
    %1722 = vmatmul.mubr.bf16.gmra.mrb[0].mxu0 %v972
    %v1723 = vpop.f32.mrb[0].mxu0
    %v1724 = vadd.f32 %v992, %v1723
    %v1725 = vpop.f32.mrb[0].mxu0
    %v1726 = vadd.f32 %v996, %v1725
    %v1727 = vpop.f32.mrb[0].mxu0
    %v1728 = vadd.f32 %v992, %v1727
    %v1729 = vpop.f32.mrb[0].mxu0
    %v1730 = vadd.f32 %v996, %v1729
    %1731 = vmatprep.mubr.bf16.mxu0 %v977
    %1732 = vmatmul.mubr.bf16.gmra.mrb[0].mxu0 %v976
    %v1733 = vpop.f32.mrb[0].mxu0
    %v1734 = vadd.f32 %v992, %v1733
    %v1735 = vpop.f32.mrb[0].mxu0
    %v1736 = vadd.f32 %v996, %v1735
    %v1737 = vpop.f32.mrb[0].mxu0
    %v1738 = vadd.f32 %v992, %v1737
    %v1739 = vpop.f32.mrb[0].mxu0
    %v1740 = vadd.f32 %v996, %v1739
    %1741 = vmatprep.mubr.bf16.mxu0 %v981
    %1742 = vmatmul.mubr.bf16.gmra.mrb[0].mxu0 %v980
    %v1743 = vpop.f32.mrb[0].mxu0
    %v1744 = vadd.f32 %v992, %v1743
    %v1745 = vpop.f32.mrb[0].mxu0
    %v1746 = vadd.f32 %v996, %v1745
    %v1747 = vpop.f32.mrb[0].mxu0
    %v1748 = vadd.f32 %v992, %v1747
    %v1749 = vpop.f32.mrb[0].mxu0
    %v1750 = vadd.f32 %v996, %v1749
    %1751 = vmatprep.mubr.bf16.mxu0 %v985
    %1752 = vmatmul.mubr.bf16.gmra.mrb[0].mxu0 %v984
    %v1753 = vpop.f32.mrb[0].mxu0
    %v1754 = vadd.f32 %v992, %v1753
    %v1755 = vpop.f32.mrb[0].mxu0
    %v1756 = vadd.f32 %v996, %v1755
    %v1757 = vpop.f32.mrb[0].mxu0
    %v1758 = vadd.f32 %v992, %v1757
    %v1759 = vpop.f32.mrb[0].mxu0
    %v1760 = vadd.f32 %v996, %v1759
    %1761 = vdwg.mxu0
    %1762 = vmatprep.subr.bf16.mxu0 %v1458
    %1763 = vmatpush1.bf16.msra.mxu0 %v1457
    %1764 = vmatprep.subr.bf16.mxu0 %v1462
    %1765 = vmatpush1.bf16.msra.mxu0 %v1461
    %1766 = vmatprep.subr.bf16.mxu0 %v1466
    %1767 = vmatpush1.bf16.msra.mxu0 %v1465
    %1768 = vmatprep.subr.bf16.mxu0 %v1470
    %1769 = vmatpush1.bf16.msra.mxu0 %v1469
    %1770 = vmatprep.subr.bf16.mxu0 %v1474
    %1771 = vmatpush1.bf16.msra.mxu0 %v1473
    %1772 = vmatprep.subr.bf16.mxu0 %v1478
    %1773 = vmatpush1.bf16.msra.mxu0 %v1477
    %1774 = vmatprep.subr.bf16.mxu0 %v1482
    %1775 = vmatpush1.bf16.msra.mxu0 %v1481
    %1776 = vmatprep.subr.bf16.mxu0 %v1486
    %1777 = vmatpush1.bf16.msra.mxu0 %v1485
    %1778 = vmatprep.subr.bf16.mxu0 %v1490
    %1779 = vmatpush1.bf16.msra.mxu0 %v1489
    %1780 = vmatprep.subr.bf16.mxu0 %v1494
    %1781 = vmatpush1.bf16.msra.mxu0 %v1493
    %1782 = vmatprep.subr.bf16.mxu0 %v1498
    %1783 = vmatpush1.bf16.msra.mxu0 %v1497
    %1784 = vmatprep.subr.bf16.mxu0 %v1502
    %1785 = vmatpush1.bf16.msra.mxu0 %v1501
    %1786 = vmatprep.subr.bf16.mxu0 %v1506
    %1787 = vmatpush1.bf16.msra.mxu0 %v1505
    %1788 = vmatprep.subr.bf16.mxu0 %v1510
    %1789 = vmatpush1.bf16.msra.mxu0 %v1509
    %1790 = vmatprep.subr.bf16.mxu0 %v1514
    %1791 = vmatpush1.bf16.msra.mxu0 %v1513
    %1792 = vmatprep.subr.bf16.mxu0 %v1518
    %1793 = vmatpush1.bf16.msra.mxu0 %v1517
    %1794 = vmatprep.mubr.bf16.mxu0 %v959
    %1795 = vmatmul.mubr.bf16.gmra.mrb[0].mxu0 %v958
    %v1796 = vpop.f32.mrb[0].mxu0
    %v1797 = vadd.f32 %v1684, %v1796
    %v1798 = vpop.f32.mrb[0].mxu0
    %v1799 = vadd.f32 %v1686, %v1798
    %v1800 = vpop.f32.mrb[0].mxu0
    %v1801 = vadd.f32 %v1688, %v1800
    %v1802 = vpop.f32.mrb[0].mxu0
    %v1803 = vadd.f32 %v1690, %v1802
    %1804 = vmatprep.mubr.bf16.mxu0 %v963
    %1805 = vmatmul.mubr.bf16.gmra.mrb[0].mxu0 %v962
    %v1806 = vpop.f32.mrb[0].mxu0
    %v1807 = vadd.f32 %v1694, %v1806
    %v1808 = vpop.f32.mrb[0].mxu0
    %v1809 = vadd.f32 %v1696, %v1808
    %v1810 = vpop.f32.mrb[0].mxu0
    %v1811 = vadd.f32 %v1698, %v1810
    %v1812 = vpop.f32.mrb[0].mxu0
    %v1813 = vadd.f32 %v1700, %v1812
    %1814 = vmatprep.mubr.bf16.mxu0 %v967
    %1815 = vmatmul.mubr.bf16.gmra.mrb[0].mxu0 %v966
    %v1816 = vpop.f32.mrb[0].mxu0
    %v1817 = vadd.f32 %v1704, %v1816
    %v1818 = vpop.f32.mrb[0].mxu0
    %v1819 = vadd.f32 %v1706, %v1818
    %v1820 = vpop.f32.mrb[0].mxu0
    %v1821 = vadd.f32 %v1708, %v1820
    %v1822 = vpop.f32.mrb[0].mxu0
    %v1823 = vadd.f32 %v1710, %v1822
    %1824 = vmatprep.mubr.bf16.mxu0 %v971
    %1825 = vmatmul.mubr.bf16.gmra.mrb[0].mxu0 %v970
    %v1826 = vpop.f32.mrb[0].mxu0
    %v1827 = vadd.f32 %v1714, %v1826
    %v1828 = vpop.f32.mrb[0].mxu0
    %v1829 = vadd.f32 %v1716, %v1828
    %v1830 = vpop.f32.mrb[0].mxu0
    %v1831 = vadd.f32 %v1718, %v1830
    %v1832 = vpop.f32.mrb[0].mxu0
    %v1833 = vadd.f32 %v1720, %v1832
    %1834 = vmatprep.mubr.bf16.mxu0 %v975
    %1835 = vmatmul.mubr.bf16.gmra.mrb[0].mxu0 %v974
    %v1836 = vpop.f32.mrb[0].mxu0
    %v1837 = vadd.f32 %v1724, %v1836
    %v1838 = vpop.f32.mrb[0].mxu0
    %v1839 = vadd.f32 %v1726, %v1838
    %v1840 = vpop.f32.mrb[0].mxu0
    %v1841 = vadd.f32 %v1728, %v1840
    %v1842 = vpop.f32.mrb[0].mxu0
    %v1843 = vadd.f32 %v1730, %v1842
    %1844 = vmatprep.mubr.bf16.mxu0 %v979
    %1845 = vmatmul.mubr.bf16.gmra.mrb[0].mxu0 %v978
    %v1846 = vpop.f32.mrb[0].mxu0
    %v1847 = vadd.f32 %v1734, %v1846
    %v1848 = vpop.f32.mrb[0].mxu0
    %v1849 = vadd.f32 %v1736, %v1848
    %v1850 = vpop.f32.mrb[0].mxu0
    %v1851 = vadd.f32 %v1738, %v1850
    %v1852 = vpop.f32.mrb[0].mxu0
    %v1853 = vadd.f32 %v1740, %v1852
    %1854 = vmatprep.mubr.bf16.mxu0 %v983
    %1855 = vmatmul.mubr.bf16.gmra.mrb[0].mxu0 %v982
    %v1856 = vpop.f32.mrb[0].mxu0
    %v1857 = vadd.f32 %v1744, %v1856
    %v1858 = vpop.f32.mrb[0].mxu0
    %v1859 = vadd.f32 %v1746, %v1858
    %v1860 = vpop.f32.mrb[0].mxu0
    %v1861 = vadd.f32 %v1748, %v1860
    %v1862 = vpop.f32.mrb[0].mxu0
    %v1863 = vadd.f32 %v1750, %v1862
    %1864 = vmatprep.mubr.bf16.mxu0 %v987
    %1865 = vmatmul.mubr.bf16.gmra.mrb[0].mxu0 %v986
    %v1866 = vpop.f32.mrb[0].mxu0
    %v1867 = vadd.f32 %v1754, %v1866
    %v1868 = vpop.f32.mrb[0].mxu0
    %v1869 = vadd.f32 %v1756, %v1868
    %v1870 = vpop.f32.mrb[0].mxu0
    %v1871 = vadd.f32 %v1758, %v1870
    %v1872 = vpop.f32.mrb[0].mxu0
    %v1873 = vadd.f32 %v1760, %v1872
    %1874 = vdwg.mxu0
    %1875 = vmatprep.subr.bf16.mxu0 %v1396
    %1876 = vmatpush1.bf16.msra.mxu0 %v1395
    %1877 = vmatprep.subr.bf16.mxu0 %v1400
    %1878 = vmatpush1.bf16.msra.mxu0 %v1399
    %1879 = vmatprep.subr.bf16.mxu0 %v1404
    %1880 = vmatpush1.bf16.msra.mxu0 %v1403
    %1881 = vmatprep.subr.bf16.mxu0 %v1408
    %1882 = vmatpush1.bf16.msra.mxu0 %v1407
    %1883 = vmatprep.subr.bf16.mxu0 %v1412
    %1884 = vmatpush1.bf16.msra.mxu0 %v1411
    %1885 = vmatprep.subr.bf16.mxu0 %v1416
    %1886 = vmatpush1.bf16.msra.mxu0 %v1415
    %1887 = vmatprep.subr.bf16.mxu0 %v1420
    %1888 = vmatpush1.bf16.msra.mxu0 %v1419
    %1889 = vmatprep.subr.bf16.mxu0 %v1424
    %1890 = vmatpush1.bf16.msra.mxu0 %v1423
    %1891 = vmatprep.subr.bf16.mxu0 %v1428
    %1892 = vmatpush1.bf16.msra.mxu0 %v1427
    %1893 = vmatprep.subr.bf16.mxu0 %v1432
    %1894 = vmatpush1.bf16.msra.mxu0 %v1431
    %1895 = vmatprep.subr.bf16.mxu0 %v1436
    %1896 = vmatpush1.bf16.msra.mxu0 %v1435
    %1897 = vmatprep.subr.bf16.mxu0 %v1440
    %1898 = vmatpush1.bf16.msra.mxu0 %v1439
    %1899 = vmatprep.subr.bf16.mxu0 %v1444
    %1900 = vmatpush1.bf16.msra.mxu0 %v1443
    %1901 = vmatprep.subr.bf16.mxu0 %v1448
    %1902 = vmatpush1.bf16.msra.mxu0 %v1447
    %1903 = vmatprep.subr.bf16.mxu0 %v1452
    %1904 = vmatpush1.bf16.msra.mxu0 %v1451
    %1905 = vmatprep.subr.bf16.mxu0 %v1456
    %1906 = vmatpush1.bf16.msra.mxu0 %v1455
    %1907 = vmatprep.mubr.bf16.mxu0 %v957
    %1908 = vmatmul.mubr.bf16.gmra.mrb[0].mxu0 %v956
    %v1909 = vpop.f32.mrb[0].mxu0
    %v1910 = vadd.f32 %v1000, %v1909
    %v1911 = vpop.f32.mrb[0].mxu0
    %v1912 = vadd.f32 %v1004, %v1911
    %v1913 = vpop.f32.mrb[0].mxu0
    %v1914 = vadd.f32 %v1000, %v1913
    %v1915 = vpop.f32.mrb[0].mxu0
    %v1916 = vadd.f32 %v1004, %v1915
    %1917 = vmatprep.mubr.bf16.mxu0 %v961
    %1918 = vmatmul.mubr.bf16.gmra.mrb[0].mxu0 %v960
    %v1919 = vpop.f32.mrb[0].mxu0
    %v1920 = vadd.f32 %v1000, %v1919
    %v1921 = vpop.f32.mrb[0].mxu0
    %v1922 = vadd.f32 %v1004, %v1921
    %v1923 = vpop.f32.mrb[0].mxu0
    %v1924 = vadd.f32 %v1000, %v1923
    %v1925 = vpop.f32.mrb[0].mxu0
    %v1926 = vadd.f32 %v1004, %v1925
    %1927 = vmatprep.mubr.bf16.mxu0 %v965
    %1928 = vmatmul.mubr.bf16.gmra.mrb[0].mxu0 %v964
    %v1929 = vpop.f32.mrb[0].mxu0
    %v1930 = vadd.f32 %v1000, %v1929
    %v1931 = vpop.f32.mrb[0].mxu0
    %v1932 = vadd.f32 %v1004, %v1931
    %v1933 = vpop.f32.mrb[0].mxu0
    %v1934 = vadd.f32 %v1000, %v1933
    %v1935 = vpop.f32.mrb[0].mxu0
    %v1936 = vadd.f32 %v1004, %v1935
    %1937 = vmatprep.mubr.bf16.mxu0 %v969
    %1938 = vmatmul.mubr.bf16.gmra.mrb[0].mxu0 %v968
    %v1939 = vpop.f32.mrb[0].mxu0
    %v1940 = vadd.f32 %v1000, %v1939
    %v1941 = vpop.f32.mrb[0].mxu0
    %v1942 = vadd.f32 %v1004, %v1941
    %v1943 = vpop.f32.mrb[0].mxu0
    %v1944 = vadd.f32 %v1000, %v1943
    %v1945 = vpop.f32.mrb[0].mxu0
    %v1946 = vadd.f32 %v1004, %v1945
    %1947 = vmatprep.mubr.bf16.mxu0 %v973
    %1948 = vmatmul.mubr.bf16.gmra.mrb[0].mxu0 %v972
    %v1949 = vpop.f32.mrb[0].mxu0
    %v1950 = vadd.f32 %v1000, %v1949
    %v1951 = vpop.f32.mrb[0].mxu0
    %v1952 = vadd.f32 %v1004, %v1951
    %v1953 = vpop.f32.mrb[0].mxu0
    %v1954 = vadd.f32 %v1000, %v1953
    %v1955 = vpop.f32.mrb[0].mxu0
    %v1956 = vadd.f32 %v1004, %v1955
    %1957 = vmatprep.mubr.bf16.mxu0 %v977
    %1958 = vmatmul.mubr.bf16.gmra.mrb[0].mxu0 %v976
    %v1959 = vpop.f32.mrb[0].mxu0
    %v1960 = vadd.f32 %v1000, %v1959
    %v1961 = vpop.f32.mrb[0].mxu0
    %v1962 = vadd.f32 %v1004, %v1961
    %v1963 = vpop.f32.mrb[0].mxu0
    %v1964 = vadd.f32 %v1000, %v1963
    %v1965 = vpop.f32.mrb[0].mxu0
    %v1966 = vadd.f32 %v1004, %v1965
    %1967 = vmatprep.mubr.bf16.mxu0 %v981
    %1968 = vmatmul.mubr.bf16.gmra.mrb[0].mxu0 %v980
    %v1969 = vpop.f32.mrb[0].mxu0
    %v1970 = vadd.f32 %v1000, %v1969
    %v1971 = vpop.f32.mrb[0].mxu0
    %v1972 = vadd.f32 %v1004, %v1971
    %v1973 = vpop.f32.mrb[0].mxu0
    %v1974 = vadd.f32 %v1000, %v1973
    %v1975 = vpop.f32.mrb[0].mxu0
    %v1976 = vadd.f32 %v1004, %v1975
    %1977 = vmatprep.mubr.bf16.mxu0 %v985
    %1978 = vmatmul.mubr.bf16.gmra.mrb[0].mxu0 %v984
    %v1979 = vpop.f32.mrb[0].mxu0
    %v1980 = vadd.f32 %v1000, %v1979
    %v1981 = vpop.f32.mrb[0].mxu0
    %v1982 = vadd.f32 %v1004, %v1981
    %v1983 = vpop.f32.mrb[0].mxu0
    %v1984 = vadd.f32 %v1000, %v1983
    %v1985 = vpop.f32.mrb[0].mxu0
    %v1986 = vadd.f32 %v1004, %v1985
    %1987 = vdwg.mxu0
    %1988 = vmatprep.subr.bf16.mxu0 %v1460
    %1989 = vmatpush1.bf16.msra.mxu0 %v1459
    %1990 = vmatprep.subr.bf16.mxu0 %v1464
    %1991 = vmatpush1.bf16.msra.mxu0 %v1463
    %1992 = vmatprep.subr.bf16.mxu0 %v1468
    %1993 = vmatpush1.bf16.msra.mxu0 %v1467
    %1994 = vmatprep.subr.bf16.mxu0 %v1472
    %1995 = vmatpush1.bf16.msra.mxu0 %v1471
    %1996 = vmatprep.subr.bf16.mxu0 %v1476
    %1997 = vmatpush1.bf16.msra.mxu0 %v1475
    %1998 = vmatprep.subr.bf16.mxu0 %v1480
    %1999 = vmatpush1.bf16.msra.mxu0 %v1479
    %2000 = vmatprep.subr.bf16.mxu0 %v1484
    %2001 = vmatpush1.bf16.msra.mxu0 %v1483
    %2002 = vmatprep.subr.bf16.mxu0 %v1488
    %2003 = vmatpush1.bf16.msra.mxu0 %v1487
    %2004 = vmatprep.subr.bf16.mxu0 %v1492
    %2005 = vmatpush1.bf16.msra.mxu0 %v1491
    %2006 = vmatprep.subr.bf16.mxu0 %v1496
    %2007 = vmatpush1.bf16.msra.mxu0 %v1495
    %2008 = vmatprep.subr.bf16.mxu0 %v1500
    %2009 = vmatpush1.bf16.msra.mxu0 %v1499
    %2010 = vmatprep.subr.bf16.mxu0 %v1504
    %2011 = vmatpush1.bf16.msra.mxu0 %v1503
    %2012 = vmatprep.subr.bf16.mxu0 %v1508
    %2013 = vmatpush1.bf16.msra.mxu0 %v1507
    %2014 = vmatprep.subr.bf16.mxu0 %v1512
    %2015 = vmatpush1.bf16.msra.mxu0 %v1511
    %2016 = vmatprep.subr.bf16.mxu0 %v1516
    %2017 = vmatpush1.bf16.msra.mxu0 %v1515
    %2018 = vmatprep.subr.bf16.mxu0 %v1520
    %2019 = vmatpush1.bf16.msra.mxu0 %v1519
    %2020 = vmatprep.mubr.bf16.mxu0 %v959
    %2021 = vmatmul.mubr.bf16.gmra.mrb[0].mxu0 %v958
    %v2022 = vpop.f32.mrb[0].mxu0
    %v2023 = vadd.f32 %v1910, %v2022
    %v2024 = vpop.f32.mrb[0].mxu0
    %v2025 = vadd.f32 %v1912, %v2024
    %v2026 = vpop.f32.mrb[0].mxu0
    %v2027 = vadd.f32 %v1914, %v2026
    %v2028 = vpop.f32.mrb[0].mxu0
    %v2029 = vadd.f32 %v1916, %v2028
    %2030 = vmatprep.mubr.bf16.mxu0 %v963
    %2031 = vmatmul.mubr.bf16.gmra.mrb[0].mxu0 %v962
    %v2032 = vpop.f32.mrb[0].mxu0
    %v2033 = vadd.f32 %v1920, %v2032
    %v2034 = vpop.f32.mrb[0].mxu0
    %v2035 = vadd.f32 %v1922, %v2034
    %v2036 = vpop.f32.mrb[0].mxu0
    %v2037 = vadd.f32 %v1924, %v2036
    %v2038 = vpop.f32.mrb[0].mxu0
    %v2039 = vadd.f32 %v1926, %v2038
    %2040 = vmatprep.mubr.bf16.mxu0 %v967
    %2041 = vmatmul.mubr.bf16.gmra.mrb[0].mxu0 %v966
    %v2042 = vpop.f32.mrb[0].mxu0
    %v2043 = vadd.f32 %v1930, %v2042
    %v2044 = vpop.f32.mrb[0].mxu0
    %v2045 = vadd.f32 %v1932, %v2044
    %v2046 = vpop.f32.mrb[0].mxu0
    %v2047 = vadd.f32 %v1934, %v2046
    %v2048 = vpop.f32.mrb[0].mxu0
    %v2049 = vadd.f32 %v1936, %v2048
    %2050 = vmatprep.mubr.bf16.mxu0 %v971
    %2051 = vmatmul.mubr.bf16.gmra.mrb[0].mxu0 %v970
    %v2052 = vpop.f32.mrb[0].mxu0
    %v2053 = vadd.f32 %v1940, %v2052
    %v2054 = vpop.f32.mrb[0].mxu0
    %v2055 = vadd.f32 %v1942, %v2054
    %v2056 = vpop.f32.mrb[0].mxu0
    %v2057 = vadd.f32 %v1944, %v2056
    %v2058 = vpop.f32.mrb[0].mxu0
    %v2059 = vadd.f32 %v1946, %v2058
    %2060 = vmatprep.mubr.bf16.mxu0 %v975
    %2061 = vmatmul.mubr.bf16.gmra.mrb[0].mxu0 %v974
    %v2062 = vpop.f32.mrb[0].mxu0
    %v2063 = vadd.f32 %v1950, %v2062
    %v2064 = vpop.f32.mrb[0].mxu0
    %v2065 = vadd.f32 %v1952, %v2064
    %v2066 = vpop.f32.mrb[0].mxu0
    %v2067 = vadd.f32 %v1954, %v2066
    %v2068 = vpop.f32.mrb[0].mxu0
    %v2069 = vadd.f32 %v1956, %v2068
    %2070 = vmatprep.mubr.bf16.mxu0 %v979
    %2071 = vmatmul.mubr.bf16.gmra.mrb[0].mxu0 %v978
    %v2072 = vpop.f32.mrb[0].mxu0
    %v2073 = vadd.f32 %v1960, %v2072
    %v2074 = vpop.f32.mrb[0].mxu0
    %v2075 = vadd.f32 %v1962, %v2074
    %v2076 = vpop.f32.mrb[0].mxu0
    %v2077 = vadd.f32 %v1964, %v2076
    %v2078 = vpop.f32.mrb[0].mxu0
    %v2079 = vadd.f32 %v1966, %v2078
    %2080 = vmatprep.mubr.bf16.mxu0 %v983
    %2081 = vmatmul.mubr.bf16.gmra.mrb[0].mxu0 %v982
    %v2082 = vpop.f32.mrb[0].mxu0
    %v2083 = vadd.f32 %v1970, %v2082
    %v2084 = vpop.f32.mrb[0].mxu0
    %v2085 = vadd.f32 %v1972, %v2084
    %v2086 = vpop.f32.mrb[0].mxu0
    %v2087 = vadd.f32 %v1974, %v2086
    %v2088 = vpop.f32.mrb[0].mxu0
    %v2089 = vadd.f32 %v1976, %v2088
    %2090 = vmatprep.mubr.bf16.mxu0 %v987
    %2091 = vmatmul.mubr.bf16.gmra.mrb[0].mxu0 %v986
    %v2092 = vpop.f32.mrb[0].mxu0
    %v2093 = vadd.f32 %v1980, %v2092
    %v2094 = vpop.f32.mrb[0].mxu0
    %v2095 = vadd.f32 %v1982, %v2094
    %v2096 = vpop.f32.mrb[0].mxu0
    %v2097 = vadd.f32 %v1984, %v2096
    %v2098 = vpop.f32.mrb[0].mxu0
    %v2099 = vadd.f32 %v1986, %v2098
    %2100 = vdwg.mxu0
    %v2101 = vmax.f32 %v1797, 0.0
    %v2102 = vmax.f32 %v1799, 0.0
    %v2103 = vmax.f32 %v2023, 0.0
    %v2104 = vmax.f32 %v2025, 0.0
    %v2105 = vmax.f32 %v1801, 0.0
    %v2106 = vmax.f32 %v1803, 0.0
    %v2107 = vmax.f32 %v2027, 0.0
    %v2108 = vmax.f32 %v2029, 0.0
    %v2109 = vmax.f32 %v1807, 0.0
    %v2110 = vmax.f32 %v1809, 0.0
    %v2111 = vmax.f32 %v2033, 0.0
    %v2112 = vmax.f32 %v2035, 0.0
    %v2113 = vmax.f32 %v1811, 0.0
    %v2114 = vmax.f32 %v1813, 0.0
    %v2115 = vmax.f32 %v2037, 0.0
    %v2116 = vmax.f32 %v2039, 0.0
    %v2117 = vmax.f32 %v1817, 0.0
    %v2118 = vmax.f32 %v1819, 0.0
    %v2119 = vmax.f32 %v2043, 0.0
    %v2120 = vmax.f32 %v2045, 0.0
    %v2121 = vmax.f32 %v1821, 0.0
    %v2122 = vmax.f32 %v1823, 0.0
    %v2123 = vmax.f32 %v2047, 0.0
    %v2124 = vmax.f32 %v2049, 0.0
    %v2125 = vmax.f32 %v1827, 0.0
    %v2126 = vmax.f32 %v1829, 0.0
    %v2127 = vmax.f32 %v2053, 0.0
    %v2128 = vmax.f32 %v2055, 0.0
    %v2129 = vmax.f32 %v1831, 0.0
    %v2130 = vmax.f32 %v1833, 0.0
    %v2131 = vmax.f32 %v2057, 0.0
    %v2132 = vmax.f32 %v2059, 0.0
    %v2133 = vmax.f32 %v1837, 0.0
    %v2134 = vmax.f32 %v1839, 0.0
    %v2135 = vmax.f32 %v2063, 0.0
    %v2136 = vmax.f32 %v2065, 0.0
    %v2137 = vmax.f32 %v1841, 0.0
    %v2138 = vmax.f32 %v1843, 0.0
    %v2139 = vmax.f32 %v2067, 0.0
    %v2140 = vmax.f32 %v2069, 0.0
    %v2141 = vmax.f32 %v1847, 0.0
    %v2142 = vmax.f32 %v1849, 0.0
    %v2143 = vmax.f32 %v2073, 0.0
    %v2144 = vmax.f32 %v2075, 0.0
    %v2145 = vmax.f32 %v1851, 0.0
    %v2146 = vmax.f32 %v1853, 0.0
    %v2147 = vmax.f32 %v2077, 0.0
    %v2148 = vmax.f32 %v2079, 0.0
    %v2149 = vmax.f32 %v1857, 0.0
    %v2150 = vmax.f32 %v1859, 0.0
    %v2151 = vmax.f32 %v2083, 0.0
    %v2152 = vmax.f32 %v2085, 0.0
    %v2153 = vmax.f32 %v1861, 0.0
    %v2154 = vmax.f32 %v1863, 0.0
    %v2155 = vmax.f32 %v2087, 0.0
    %v2156 = vmax.f32 %v2089, 0.0
    %v2157 = vmax.f32 %v1867, 0.0
    %v2158 = vmax.f32 %v1869, 0.0
    %v2159 = vmax.f32 %v2093, 0.0
    %v2160 = vmax.f32 %v2095, 0.0
    %v2161 = vmax.f32 %v1871, 0.0
    %v2162 = vmax.f32 %v1873, 0.0
    %v2163 = vmax.f32 %v2097, 0.0
    %v2164 = vmax.f32 %v2099, 0.0
    %v2165 = vld [vmem:[#allocation8] sm:$0xf]
    %v2166 = vld [vmem:[#allocation8 + $0x4] sm:$0xf]
    %v2167 = vld [vmem:[#allocation8 + $0x8] sm:$0xf]
    %v2168 = vld [vmem:[#allocation8 + $0xc] sm:$0xf]
    %v2169 = vld [vmem:[#allocation8 + $0x10] sm:$0xf]
    %v2170 = vld [vmem:[#allocation8 + $0x14] sm:$0xf]
    %v2171 = vld [vmem:[#allocation8 + $0x18] sm:$0xf]
    %v2172 = vld [vmem:[#allocation8 + $0x1c] sm:$0xf]
    %v2173 = vld [vmem:[#allocation8 + $0x20] sm:$0xf]
    %v2174 = vld [vmem:[#allocation8 + $0x24] sm:$0xf]
    %v2175 = vld [vmem:[#allocation8 + $0x28] sm:$0xf]
    %v2176 = vld [vmem:[#allocation8 + $0x2c] sm:$0xf]
    %v2177 = vld [vmem:[#allocation8 + $0x30] sm:$0xf]
    %v2178 = vld [vmem:[#allocation8 + $0x34] sm:$0xf]
    %v2179 = vld [vmem:[#allocation8 + $0x38] sm:$0xf]
    %v2180 = vld [vmem:[#allocation8 + $0x3c] sm:$0xf]
    %v2181 = vld [vmem:[#allocation8 + $0x40] sm:$0xf]
    %v2182 = vld [vmem:[#allocation8 + $0x44] sm:$0xf]
    %v2183 = vld [vmem:[#allocation8 + $0x48] sm:$0xf]
    %v2184 = vld [vmem:[#allocation8 + $0x4c] sm:$0xf]
    %v2185 = vld [vmem:[#allocation8 + $0x50] sm:$0xf]
    %v2186 = vld [vmem:[#allocation8 + $0x54] sm:$0xf]
    %v2187 = vld [vmem:[#allocation8 + $0x58] sm:$0xf]
    %v2188 = vld [vmem:[#allocation8 + $0x5c] sm:$0xf]
    %v2189 = vld [vmem:[#allocation8 + $0x60] sm:$0xf]
    %v2190 = vld [vmem:[#allocation8 + $0x64] sm:$0xf]
    %v2191 = vld [vmem:[#allocation8 + $0x68] sm:$0xf]
    %v2192 = vld [vmem:[#allocation8 + $0x6c] sm:$0xf]
    %v2193 = vld [vmem:[#allocation8 + $0x70] sm:$0xf]
    %v2194 = vld [vmem:[#allocation8 + $0x74] sm:$0xf]
    %v2195 = vld [vmem:[#allocation8 + $0x78] sm:$0xf]
    %v2196 = vld [vmem:[#allocation8 + $0x7c] sm:$0xf]
    %v2197 = vld [vmem:[#allocation8 + $0x80] sm:$0xf]
    %v2198 = vld [vmem:[#allocation8 + $0x84] sm:$0xf]
    %v2199 = vld [vmem:[#allocation8 + $0x88] sm:$0xf]
    %v2200 = vld [vmem:[#allocation8 + $0x8c] sm:$0xf]
    %v2201 = vld [vmem:[#allocation8 + $0x90] sm:$0xf]
    %v2202 = vld [vmem:[#allocation8 + $0x94] sm:$0xf]
    %v2203 = vld [vmem:[#allocation8 + $0x98] sm:$0xf]
    %v2204 = vld [vmem:[#allocation8 + $0x9c] sm:$0xf]
    %v2205 = vld [vmem:[#allocation8 + $0xa0] sm:$0xf]
    %v2206 = vld [vmem:[#allocation8 + $0xa4] sm:$0xf]
    %v2207 = vld [vmem:[#allocation8 + $0xa8] sm:$0xf]
    %v2208 = vld [vmem:[#allocation8 + $0xac] sm:$0xf]
    %v2209 = vld [vmem:[#allocation8 + $0xb0] sm:$0xf]
    %v2210 = vld [vmem:[#allocation8 + $0xb4] sm:$0xf]
    %v2211 = vld [vmem:[#allocation8 + $0xb8] sm:$0xf]
    %v2212 = vld [vmem:[#allocation8 + $0xbc] sm:$0xf]
    %v2213 = vld [vmem:[#allocation8 + $0xc0] sm:$0xf]
    %v2214 = vld [vmem:[#allocation8 + $0xc4] sm:$0xf]
    %v2215 = vld [vmem:[#allocation8 + $0xc8] sm:$0xf]
    %v2216 = vld [vmem:[#allocation8 + $0xcc] sm:$0xf]
    %v2217 = vld [vmem:[#allocation8 + $0xd0] sm:$0xf]
    %v2218 = vld [vmem:[#allocation8 + $0xd4] sm:$0xf]
    %v2219 = vld [vmem:[#allocation8 + $0xd8] sm:$0xf]
    %v2220 = vld [vmem:[#allocation8 + $0xdc] sm:$0xf]
    %v2221 = vld [vmem:[#allocation8 + $0xe0] sm:$0xf]
    %v2222 = vld [vmem:[#allocation8 + $0xe4] sm:$0xf]
    %v2223 = vld [vmem:[#allocation8 + $0xe8] sm:$0xf]
    %v2224 = vld [vmem:[#allocation8 + $0xec] sm:$0xf]
    %v2225 = vld [vmem:[#allocation8 + $0xf0] sm:$0xf]
    %v2226 = vld [vmem:[#allocation8 + $0xf4] sm:$0xf]
    %v2227 = vld [vmem:[#allocation8 + $0xf8] sm:$0xf]
    %v2228 = vld [vmem:[#allocation8 + $0xfc] sm:$0xf]
    %v2229 = vld [vmem:[%s6] sm:$0x1]
    %v2230 = vpack.c.bf16 %v2105, %v2101
    %v2231 = vpack.c.bf16 %v2106, %v2102
    %v2232 = vpack.c.bf16 %v2107, %v2103
    %v2233 = vpack.c.bf16 %v2108, %v2104
    %v2234 = vpack.c.bf16 %v2113, %v2109
    %v2235 = vpack.c.bf16 %v2114, %v2110
    %v2236 = vpack.c.bf16 %v2115, %v2111
    %v2237 = vpack.c.bf16 %v2116, %v2112
    %v2238 = vpack.c.bf16 %v2121, %v2117
    %v2239 = vpack.c.bf16 %v2122, %v2118
    %v2240 = vpack.c.bf16 %v2123, %v2119
    %v2241 = vpack.c.bf16 %v2124, %v2120
    %v2242 = vpack.c.bf16 %v2129, %v2125
    %v2243 = vpack.c.bf16 %v2130, %v2126
    %v2244 = vpack.c.bf16 %v2131, %v2127
    %v2245 = vpack.c.bf16 %v2132, %v2128
    %v2246 = vpack.c.bf16 %v2137, %v2133
    %v2247 = vpack.c.bf16 %v2138, %v2134
    %v2248 = vpack.c.bf16 %v2139, %v2135
    %v2249 = vpack.c.bf16 %v2140, %v2136
    %v2250 = vpack.c.bf16 %v2145, %v2141
    %v2251 = vpack.c.bf16 %v2146, %v2142
    %v2252 = vpack.c.bf16 %v2147, %v2143
    %v2253 = vpack.c.bf16 %v2148, %v2144
    %v2254 = vpack.c.bf16 %v2153, %v2149
    %v2255 = vpack.c.bf16 %v2154, %v2150
    %v2256 = vpack.c.bf16 %v2155, %v2151
    %v2257 = vpack.c.bf16 %v2156, %v2152
    %v2258 = vpack.c.bf16 %v2161, %v2157
    %v2259 = vpack.c.bf16 %v2162, %v2158
    %v2260 = vpack.c.bf16 %v2163, %v2159
    %v2261 = vpack.c.bf16 %v2164, %v2160
    %v2263 = vlaneseq
    %v2264 = vshrl.u32 %v2263, 7
    %v2265 = vsub.s32 0, %v2264
    %v2266 = vrot.slane %v2229, %v2265
    %v2332 = vunpack.c.l.b16 %v2165
    %v2333 = vunpack.c.l.b16 %v2166
    %v2334 = vunpack.c.l.b16 %v2167
    %v2335 = vunpack.c.l.b16 %v2168
    %v2336 = vunpack.c.l.b16 %v2169
    %v2337 = vunpack.c.l.b16 %v2170
    %v2338 = vunpack.c.l.b16 %v2171
    %v2339 = vunpack.c.l.b16 %v2172
    %v2340 = vunpack.c.l.b16 %v2173
    %v2341 = vunpack.c.l.b16 %v2174
    %v2342 = vunpack.c.l.b16 %v2175
    %v2343 = vunpack.c.l.b16 %v2176
    %v2344 = vunpack.c.l.b16 %v2177
    %v2345 = vunpack.c.l.b16 %v2178
    %v2346 = vunpack.c.l.b16 %v2179
    %v2347 = vunpack.c.l.b16 %v2180
    %v2348 = vunpack.c.l.b16 %v2181
    %v2349 = vunpack.c.l.b16 %v2182
    %v2350 = vunpack.c.l.b16 %v2183
    %v2351 = vunpack.c.l.b16 %v2184
    %v2352 = vunpack.c.l.b16 %v2185
    %v2353 = vunpack.c.l.b16 %v2186
    %v2354 = vunpack.c.l.b16 %v2187
    %v2355 = vunpack.c.l.b16 %v2188
    %v2356 = vunpack.c.l.b16 %v2189
    %v2357 = vunpack.c.l.b16 %v2190
    %v2358 = vunpack.c.l.b16 %v2191
    %v2359 = vunpack.c.l.b16 %v2192
    %v2360 = vunpack.c.l.b16 %v2193
    %v2361 = vunpack.c.l.b16 %v2194
    %v2362 = vunpack.c.l.b16 %v2195
    %v2363 = vunpack.c.l.b16 %v2196
    %v2364 = vunpack.c.l.b16 %v2197
    %v2365 = vunpack.c.l.b16 %v2198
    %v2366 = vunpack.c.l.b16 %v2199
    %v2367 = vunpack.c.l.b16 %v2200
    %v2368 = vunpack.c.l.b16 %v2201
    %v2369 = vunpack.c.l.b16 %v2202
    %v2370 = vunpack.c.l.b16 %v2203
    %v2371 = vunpack.c.l.b16 %v2204
    %v2372 = vunpack.c.l.b16 %v2205
    %v2373 = vunpack.c.l.b16 %v2206
    %v2374 = vunpack.c.l.b16 %v2207
    %v2375 = vunpack.c.l.b16 %v2208
    %v2376 = vunpack.c.l.b16 %v2209
    %v2377 = vunpack.c.l.b16 %v2210
    %v2378 = vunpack.c.l.b16 %v2211
    %v2379 = vunpack.c.l.b16 %v2212
    %v2380 = vunpack.c.l.b16 %v2213
    %v2381 = vunpack.c.l.b16 %v2214
    %v2382 = vunpack.c.l.b16 %v2215
    %v2383 = vunpack.c.l.b16 %v2216
    %v2384 = vunpack.c.l.b16 %v2217
    %v2385 = vunpack.c.l.b16 %v2218
    %v2386 = vunpack.c.l.b16 %v2219
    %v2387 = vunpack.c.l.b16 %v2220
    %v2388 = vunpack.c.l.b16 %v2221
    %v2389 = vunpack.c.l.b16 %v2222
    %v2390 = vunpack.c.l.b16 %v2223
    %v2391 = vunpack.c.l.b16 %v2224
    %v2392 = vunpack.c.l.b16 %v2225
    %v2393 = vunpack.c.l.b16 %v2226
    %v2394 = vunpack.c.l.b16 %v2227
    %v2395 = vunpack.c.l.b16 %v2228
    %v2396 = vpack.c.b16 %v2333, %v2332
    %v2397 = vpack.c.b16 %v2335, %v2334
    %v2398 = vpack.c.b16 %v2337, %v2336
    %v2399 = vpack.c.b16 %v2339, %v2338
    %v2400 = vpack.c.b16 %v2341, %v2340
    %v2401 = vpack.c.b16 %v2343, %v2342
    %v2402 = vpack.c.b16 %v2345, %v2344
    %v2403 = vpack.c.b16 %v2347, %v2346
    %v2404 = vpack.c.b16 %v2349, %v2348
    %v2405 = vpack.c.b16 %v2351, %v2350
    %v2406 = vpack.c.b16 %v2353, %v2352
    %v2407 = vpack.c.b16 %v2355, %v2354
    %v2408 = vpack.c.b16 %v2357, %v2356
    %v2409 = vpack.c.b16 %v2359, %v2358
    %v2410 = vpack.c.b16 %v2361, %v2360
    %v2411 = vpack.c.b16 %v2363, %v2362
    %v2412 = vpack.c.b16 %v2365, %v2364
    %v2413 = vpack.c.b16 %v2367, %v2366
    %v2414 = vpack.c.b16 %v2369, %v2368
    %v2415 = vpack.c.b16 %v2371, %v2370
    %v2416 = vpack.c.b16 %v2373, %v2372
    %v2417 = vpack.c.b16 %v2375, %v2374
    %v2418 = vpack.c.b16 %v2377, %v2376
    %v2419 = vpack.c.b16 %v2379, %v2378
    %v2420 = vpack.c.b16 %v2381, %v2380
    %v2421 = vpack.c.b16 %v2383, %v2382
    %v2422 = vpack.c.b16 %v2385, %v2384
    %v2423 = vpack.c.b16 %v2387, %v2386
    %v2424 = vpack.c.b16 %v2389, %v2388
    %v2425 = vpack.c.b16 %v2391, %v2390
    %v2426 = vpack.c.b16 %v2393, %v2392
    %v2427 = vpack.c.b16 %v2395, %v2394
    %2460 = vmatprep.subr.bf16.mxu0 0
    %2461 = vmatpush1.bf16.msra.mxu0 %v2396
    %2462 = vmatprep.subr.bf16.mxu0 0
    %2463 = vmatpush1.bf16.msra.mxu0 %v2397
    %2464 = vmatprep.subr.bf16.mxu0 0
    %2465 = vmatpush1.bf16.msra.mxu0 %v2398
    %2466 = vmatprep.subr.bf16.mxu0 0
    %2467 = vmatpush1.bf16.msra.mxu0 %v2399
    %2468 = vmatprep.subr.bf16.mxu0 0
    %2469 = vmatpush1.bf16.msra.mxu0 %v2400
    %2470 = vmatprep.subr.bf16.mxu0 0
    %2471 = vmatpush1.bf16.msra.mxu0 %v2401
    %2472 = vmatprep.subr.bf16.mxu0 0
    %2473 = vmatpush1.bf16.msra.mxu0 %v2402
    %2474 = vmatprep.subr.bf16.mxu0 0
    %2475 = vmatpush1.bf16.msra.mxu0 %v2403
    %2476 = vmatprep.subr.bf16.mxu0 0
    %2477 = vmatpush1.bf16.msra.mxu0 %v2404
    %2478 = vmatprep.subr.bf16.mxu0 0
    %2479 = vmatpush1.bf16.msra.mxu0 %v2405
    %2480 = vmatprep.subr.bf16.mxu0 0
    %2481 = vmatpush1.bf16.msra.mxu0 %v2406
    %2482 = vmatprep.subr.bf16.mxu0 0
    %2483 = vmatpush1.bf16.msra.mxu0 %v2407
    %2484 = vmatprep.subr.bf16.mxu0 0
    %2485 = vmatpush1.bf16.msra.mxu0 %v2408
    %2486 = vmatprep.subr.bf16.mxu0 0
    %2487 = vmatpush1.bf16.msra.mxu0 %v2409
    %2488 = vmatprep.subr.bf16.mxu0 0
    %2489 = vmatpush1.bf16.msra.mxu0 %v2410
    %2490 = vmatprep.subr.bf16.mxu0 0
    %2491 = vmatpush1.bf16.msra.mxu0 %v2411
    %2492 = vmatprep.mubr.bf16.mxu0 %v2231
    %2493 = vmatmul.mubr.bf16.gmra.mrb[0].mxu0 %v2230
    %v2494 = vpop.f32.mrb[0].mxu0
    %v2495 = vadd.f32 %v2266, %v2494
    %v2496 = vpop.f32.mrb[0].mxu0
    %v2497 = vpop.f32.mrb[0].mxu0
    %v2498 = vadd.f32 %v2266, %v2497
    %v2499 = vpop.f32.mrb[0].mxu0
    %2500 = vmatprep.mubr.bf16.mxu0 %v2235
    %2501 = vmatmul.mubr.bf16.gmra.mrb[0].mxu0 %v2234
    %v2502 = vpop.f32.mrb[0].mxu0
    %v2503 = vadd.f32 %v2266, %v2502
    %v2504 = vpop.f32.mrb[0].mxu0
    %v2505 = vpop.f32.mrb[0].mxu0
    %v2506 = vadd.f32 %v2266, %v2505
    %v2507 = vpop.f32.mrb[0].mxu0
    %2508 = vmatprep.mubr.bf16.mxu0 %v2239
    %2509 = vmatmul.mubr.bf16.gmra.mrb[0].mxu0 %v2238
    %v2510 = vpop.f32.mrb[0].mxu0
    %v2511 = vadd.f32 %v2266, %v2510
    %v2512 = vpop.f32.mrb[0].mxu0
    %v2513 = vpop.f32.mrb[0].mxu0
    %v2514 = vadd.f32 %v2266, %v2513
    %v2515 = vpop.f32.mrb[0].mxu0
    %2516 = vmatprep.mubr.bf16.mxu0 %v2243
    %2517 = vmatmul.mubr.bf16.gmra.mrb[0].mxu0 %v2242
    %v2518 = vpop.f32.mrb[0].mxu0
    %v2519 = vadd.f32 %v2266, %v2518
    %v2520 = vpop.f32.mrb[0].mxu0
    %v2521 = vpop.f32.mrb[0].mxu0
    %v2522 = vadd.f32 %v2266, %v2521
    %v2523 = vpop.f32.mrb[0].mxu0
    %2524 = vmatprep.mubr.bf16.mxu0 %v2247
    %2525 = vmatmul.mubr.bf16.gmra.mrb[0].mxu0 %v2246
    %v2526 = vpop.f32.mrb[0].mxu0
    %v2527 = vadd.f32 %v2266, %v2526
    %v2528 = vpop.f32.mrb[0].mxu0
    %v2529 = vpop.f32.mrb[0].mxu0
    %v2530 = vadd.f32 %v2266, %v2529
    %v2531 = vpop.f32.mrb[0].mxu0
    %2532 = vmatprep.mubr.bf16.mxu0 %v2251
    %2533 = vmatmul.mubr.bf16.gmra.mrb[0].mxu0 %v2250
    %v2534 = vpop.f32.mrb[0].mxu0
    %v2535 = vadd.f32 %v2266, %v2534
    %v2536 = vpop.f32.mrb[0].mxu0
    %v2537 = vpop.f32.mrb[0].mxu0
    %v2538 = vadd.f32 %v2266, %v2537
    %v2539 = vpop.f32.mrb[0].mxu0
    %2540 = vmatprep.mubr.bf16.mxu0 %v2255
    %2541 = vmatmul.mubr.bf16.gmra.mrb[0].mxu0 %v2254
    %v2542 = vpop.f32.mrb[0].mxu0
    %v2543 = vadd.f32 %v2266, %v2542
    %v2544 = vpop.f32.mrb[0].mxu0
    %v2545 = vpop.f32.mrb[0].mxu0
    %v2546 = vadd.f32 %v2266, %v2545
    %v2547 = vpop.f32.mrb[0].mxu0
    %2548 = vmatprep.mubr.bf16.mxu0 %v2259
    %2549 = vmatmul.mubr.bf16.gmra.mrb[0].mxu0 %v2258
    %v2550 = vpop.f32.mrb[0].mxu0
    %v2551 = vadd.f32 %v2266, %v2550
    %v2552 = vpop.f32.mrb[0].mxu0
    %v2553 = vpop.f32.mrb[0].mxu0
    %v2554 = vadd.f32 %v2266, %v2553
    %v2555 = vpop.f32.mrb[0].mxu0
    %2556 = vdwg.mxu0
    %2557 = vmatprep.subr.bf16.mxu0 0
    %2558 = vmatpush1.bf16.msra.mxu0 %v2412
    %2559 = vmatprep.subr.bf16.mxu0 0
    %2560 = vmatpush1.bf16.msra.mxu0 %v2413
    %2561 = vmatprep.subr.bf16.mxu0 0
    %2562 = vmatpush1.bf16.msra.mxu0 %v2414
    %2563 = vmatprep.subr.bf16.mxu0 0
    %2564 = vmatpush1.bf16.msra.mxu0 %v2415
    %2565 = vmatprep.subr.bf16.mxu0 0
    %2566 = vmatpush1.bf16.msra.mxu0 %v2416
    %2567 = vmatprep.subr.bf16.mxu0 0
    %2568 = vmatpush1.bf16.msra.mxu0 %v2417
    %2569 = vmatprep.subr.bf16.mxu0 0
    %2570 = vmatpush1.bf16.msra.mxu0 %v2418
    %2571 = vmatprep.subr.bf16.mxu0 0
    %2572 = vmatpush1.bf16.msra.mxu0 %v2419
    %2573 = vmatprep.subr.bf16.mxu0 0
    %2574 = vmatpush1.bf16.msra.mxu0 %v2420
    %2575 = vmatprep.subr.bf16.mxu0 0
    %2576 = vmatpush1.bf16.msra.mxu0 %v2421
    %2577 = vmatprep.subr.bf16.mxu0 0
    %2578 = vmatpush1.bf16.msra.mxu0 %v2422
    %2579 = vmatprep.subr.bf16.mxu0 0
    %2580 = vmatpush1.bf16.msra.mxu0 %v2423
    %2581 = vmatprep.subr.bf16.mxu0 0
    %2582 = vmatpush1.bf16.msra.mxu0 %v2424
    %2583 = vmatprep.subr.bf16.mxu0 0
    %2584 = vmatpush1.bf16.msra.mxu0 %v2425
    %2585 = vmatprep.subr.bf16.mxu0 0
    %2586 = vmatpush1.bf16.msra.mxu0 %v2426
    %2587 = vmatprep.subr.bf16.mxu0 0
    %2588 = vmatpush1.bf16.msra.mxu0 %v2427
    %2589 = vmatprep.mubr.bf16.mxu0 %v2233
    %2590 = vmatmul.mubr.bf16.gmra.mrb[0].mxu0 %v2232
    %v2591 = vpop.f32.mrb[0].mxu0
    %v2592 = vadd.f32 %v2495, %v2591
    %v2593 = vpop.f32.mrb[0].mxu0
    %v2594 = vpop.f32.mrb[0].mxu0
    %v2595 = vadd.f32 %v2498, %v2594
    %v2596 = vpop.f32.mrb[0].mxu0
    %2597 = vmatprep.mubr.bf16.mxu0 %v2237
    %2598 = vmatmul.mubr.bf16.gmra.mrb[0].mxu0 %v2236
    %v2599 = vpop.f32.mrb[0].mxu0
    %v2600 = vadd.f32 %v2503, %v2599
    %v2601 = vpop.f32.mrb[0].mxu0
    %v2602 = vpop.f32.mrb[0].mxu0
    %v2603 = vadd.f32 %v2506, %v2602
    %v2604 = vpop.f32.mrb[0].mxu0
    %2605 = vmatprep.mubr.bf16.mxu0 %v2241
    %2606 = vmatmul.mubr.bf16.gmra.mrb[0].mxu0 %v2240
    %v2607 = vpop.f32.mrb[0].mxu0
    %v2608 = vadd.f32 %v2511, %v2607
    %v2609 = vpop.f32.mrb[0].mxu0
    %v2610 = vpop.f32.mrb[0].mxu0
    %v2611 = vadd.f32 %v2514, %v2610
    %v2612 = vpop.f32.mrb[0].mxu0
    %2613 = vmatprep.mubr.bf16.mxu0 %v2245
    %2614 = vmatmul.mubr.bf16.gmra.mrb[0].mxu0 %v2244
    %v2615 = vpop.f32.mrb[0].mxu0
    %v2616 = vadd.f32 %v2519, %v2615
    %v2617 = vpop.f32.mrb[0].mxu0
    %v2618 = vpop.f32.mrb[0].mxu0
    %v2619 = vadd.f32 %v2522, %v2618
    %v2620 = vpop.f32.mrb[0].mxu0
    %2621 = vmatprep.mubr.bf16.mxu0 %v2249
    %2622 = vmatmul.mubr.bf16.gmra.mrb[0].mxu0 %v2248
    %v2623 = vpop.f32.mrb[0].mxu0
    %v2624 = vadd.f32 %v2527, %v2623
    %v2625 = vpop.f32.mrb[0].mxu0
    %v2626 = vpop.f32.mrb[0].mxu0
    %v2627 = vadd.f32 %v2530, %v2626
    %v2628 = vpop.f32.mrb[0].mxu0
    %2629 = vmatprep.mubr.bf16.mxu0 %v2253
    %2630 = vmatmul.mubr.bf16.gmra.mrb[0].mxu0 %v2252
    %v2631 = vpop.f32.mrb[0].mxu0
    %v2632 = vadd.f32 %v2535, %v2631
    %v2633 = vpop.f32.mrb[0].mxu0
    %v2634 = vpop.f32.mrb[0].mxu0
    %v2635 = vadd.f32 %v2538, %v2634
    %v2636 = vpop.f32.mrb[0].mxu0
    %2637 = vmatprep.mubr.bf16.mxu0 %v2257
    %2638 = vmatmul.mubr.bf16.gmra.mrb[0].mxu0 %v2256
    %v2639 = vpop.f32.mrb[0].mxu0
    %v2640 = vadd.f32 %v2543, %v2639
    %v2641 = vpop.f32.mrb[0].mxu0
    %v2642 = vpop.f32.mrb[0].mxu0
    %v2643 = vadd.f32 %v2546, %v2642
    %v2644 = vpop.f32.mrb[0].mxu0
    %2645 = vmatprep.mubr.bf16.mxu0 %v2261
    %2646 = vmatmul.mubr.bf16.gmra.mrb[0].mxu0 %v2260
    %v2647 = vpop.f32.mrb[0].mxu0
    %v2648 = vadd.f32 %v2551, %v2647
    %v2649 = vpop.f32.mrb[0].mxu0
    %v2650 = vpop.f32.mrb[0].mxu0
    %v2651 = vadd.f32 %v2554, %v2650
    %v2652 = vpop.f32.mrb[0].mxu0
    %2653 = vdwg.mxu0
    %2654 = vst [vmem:[#allocation10] sm:$0xff] %v2592
    %2655 = vst [vmem:[#allocation10 + $0x8] sm:$0xff] %v2595
    %2656 = vst [vmem:[#allocation10 + $0x10] sm:$0xff] %v2600
    %2657 = vst [vmem:[#allocation10 + $0x18] sm:$0xff] %v2603
    %2658 = vst [vmem:[#allocation10 + $0x20] sm:$0xff] %v2608
    %2659 = vst [vmem:[#allocation10 + $0x28] sm:$0xff] %v2611
    %2660 = vst [vmem:[#allocation10 + $0x30] sm:$0xff] %v2616
    %2661 = vst [vmem:[#allocation10 + $0x38] sm:$0xff] %v2619
    %2662 = vst [vmem:[#allocation10 + $0x40] sm:$0xff] %v2624
    %2663 = vst [vmem:[#allocation10 + $0x48] sm:$0xff] %v2627
    %2664 = vst [vmem:[#allocation10 + $0x50] sm:$0xff] %v2632
    %2665 = vst [vmem:[#allocation10 + $0x58] sm:$0xff] %v2635
    %2666 = vst [vmem:[#allocation10 + $0x60] sm:$0xff] %v2640
    %2667 = vst [vmem:[#allocation10 + $0x68] sm:$0xff] %v2643
    %2668 = vst [vmem:[#allocation10 + $0x70] sm:$0xff] %v2648
    %2669 = vst [vmem:[#allocation10 + $0x78] sm:$0xff] %v2651
    // Predicated region
    $region46: #{tpu_custom_call.1} parent=1 // pred_check
      _
    $region47: #{tpu_custom_call.1} parent=1 // pred_check_branch
      %2671 = sbr.rel (0) target = $region49
    $region48: #{tpu_custom_call.1} parent=1 // pred_region
      %s2673 = ssub.s32 2048, 2048
      %2674 = vsyncadd [#allocation4], %s2673
      %s2675 = sshll.u32 [#allocation10], 4
      %s2676 = int_to_ptr.vmem [resolvable:$true] %s2675
      %2681 = dma.vmem_to_hbm [thread:$0]  %s2676, 2048, %s7, [#allocation4], 128, 128, 8
    $region49: #{tpu_custom_call.1} parent=1 // pred_fallthru
      _
    // Predicated region
    $region50: #{tpu_custom_call.1} parent=1 // pred_check
      _
    $region51: #{tpu_custom_call.1} parent=1 // pred_check_branch
      %2683 = sbr.rel (0) target = $region53
    $region52: #{tpu_custom_call.1} parent=1 // pred_region
      %2684 = dma.done [#allocation4], 2048
    $region53: #{tpu_custom_call.1} parent=1 // pred_fallthru
      _
    %2685 = vsyncpa [#allocation3], 1
    %2686 = vsyncpa [#allocation6], 1
    %2687 = vsyncpa [#allocation9], 1
    %2688 = vsyncpa [#allocation4], 1

</llo_original>
